<compile_context>
chip_gen: v6e
topology: v6e:2x2x1
jax: 0.10.0
libtpu: 0.0.40
codegen_flags: <defaults>
</compile_context>

<pallas_src>
import functools

import jax
import jax.numpy as jnp
from jax.experimental import pallas as pl
from jax.experimental.pallas import tpu as pltpu

SEQ = 20              # fixed by nn.LayerNorm([20, n_out])
LN_EPS = 1e-5         # torch LayerNorm default
_TILE_B_TARGET = 32   # 32 * 20 = 640 matmul rows per grid step


def _group_indicators(tile_b, R):
    """One-hot sample-group indicators built from iota (no extra inputs/DMA).

    G[g, r]  = 1  iff row r belongs to sample g (rows g*SEQ .. g*SEQ+SEQ-1).
    GT[r, g] = G[g, r] (built directly in the transposed orientation so no
    in-register transpose is needed).
    """
    r = jax.lax.broadcasted_iota(jnp.int32, (tile_b, R), 1)
    lo = jax.lax.broadcasted_iota(jnp.int32, (tile_b, R), 0) * SEQ
    G = ((r >= lo) & (r < lo + SEQ)).astype(jnp.float32)

    rt = jax.lax.broadcasted_iota(jnp.int32, (R, tile_b), 0)
    lot = jax.lax.broadcasted_iota(jnp.int32, (R, tile_b), 1) * SEQ
    GT = ((rt >= lot) & (rt < lot + SEQ)).astype(jnp.float32)
    return G, GT


def _grouped_layernorm(h, G, GT, gamma, beta):
    """LayerNorm over every group of SEQ consecutive rows of h.

    h: (R, n_out) f32, R = tile_b * SEQ; each SEQ-row block is one sample's
    (SEQ, n_out) slab.  Shifted one-pass statistics: h is centered by the
    whole-tile mean (reusing the row sums, so the extra cost is one sublane
    reduce), which removes the E[x^2]-E[x]^2 cancellation risk.  Group reduce
    is one thin dot(G, (R,2)); broadcast back is one dot(GT, (tile_b,2)).
    """
    R, n_out = h.shape
    inv_n = 1.0 / (SEQ * n_out)

    rs = jnp.sum(h, axis=-1, keepdims=True)                    # (R, 1) row sums
    m0 = jnp.sum(rs) * (1.0 / (R * n_out))                     # whole-tile mean
    hc = h - m0                                                # shifted values
    rs_c = rs - n_out * m0                                     # row sums of hc
    rss_c = jnp.sum(hc * hc, axis=-1, keepdims=True)           # (R, 1)

    stats = jnp.concatenate([rs_c, rss_c], axis=-1)            # (R, 2)
    gstats = jnp.dot(G, stats, preferred_element_type=jnp.float32) * inv_n  # (tile_b, 2)
    gmu = gstats[:, 0:1]                                       # group mean of hc
    gvar = gstats[:, 1:2] - gmu * gmu                          # shift-invariant var
    ginv = jax.lax.rsqrt(gvar + LN_EPS)                        # (tile_b, 1)
    coef = jnp.concatenate([gmu, ginv], axis=-1)               # (tile_b, 2)

    rows = jnp.dot(GT, coef, preferred_element_type=jnp.float32)  # (R, 2) broadcast back
    return (hc - rows[:, 0:1]) * rows[:, 1:2] * gamma + beta


def _kernel_transform(x_ref, w1_ref, wt_ref, w2_ref, gb_ref, o_ref):
    # x_ref: (R, n_in).  gb_ref: (6, R, n_out) tiled LN affine params
    # [g1, b1, g2, b2, gt, bt].
    x = x_ref[...]
    R = x.shape[0]
    G, GT = _group_indicators(R // SEQ, R)

    out = jnp.dot(x, w1_ref[...], preferred_element_type=jnp.float32)   # linear1
    out = _grouped_layernorm(out, G, GT, gb_ref[0], gb_ref[1])          # norm1
    out = jnp.maximum(out, 0.0)                                         # relu
    out = jnp.dot(out.astype(w2_ref.dtype), w2_ref[...],
                  preferred_element_type=jnp.float32)                   # linear2
    out = _grouped_layernorm(out, G, GT, gb_ref[2], gb_ref[3])          # norm2

    res = jnp.dot(x, wt_ref[...], preferred_element_type=jnp.float32)   # transform
    res = _grouped_layernorm(res, G, GT, gb_ref[4], gb_ref[5])          # transform LN

    o_ref[...] = jnp.maximum(out + res, 0.0)                            # residual + relu


def _kernel_identity(x_ref, w1_ref, w2_ref, gb_ref, o_ref):
    x = x_ref[...]
    R = x.shape[0]
    G, GT = _group_indicators(R // SEQ, R)

    out = jnp.dot(x, w1_ref[...], preferred_element_type=jnp.float32)
    out = _grouped_layernorm(out, G, GT, gb_ref[0], gb_ref[1])
    out = jnp.maximum(out, 0.0)
    out = jnp.dot(out.astype(w2_ref.dtype), w2_ref[...],
                  preferred_element_type=jnp.float32)
    out = _grouped_layernorm(out, G, GT, gb_ref[2], gb_ref[3])

    # Note: with compute_dtype=bf16 the residual is the bf16-rounded x (torch
    # keeps it in f32); documented precision trade-off, default stays f32.
    o_ref[...] = jnp.maximum(out + x.astype(jnp.float32), 0.0)


def init_params(key, n_in, n_out):
    """Deterministic synthetic params (shapes match the torch module)."""
    k1, k2, k3 = jax.random.split(key, 3)
    params = {
        # torch Linear weight is (n_out, n_in); stored pre-transposed as
        # (n_in, n_out) so the kernel computes x @ W (== x @ W_torch.T).
        "w1": jax.random.normal(k1, (n_in, n_out), jnp.float32) / jnp.sqrt(n_in),
        "w2": jax.random.normal(k2, (n_out, n_out), jnp.float32) / jnp.sqrt(n_out),
        "g1": jnp.ones((SEQ, n_out), jnp.float32),
        "b1": jnp.zeros((SEQ, n_out), jnp.float32),
        "g2": jnp.ones((SEQ, n_out), jnp.float32),
        "b2": jnp.zeros((SEQ, n_out), jnp.float32),
    }
    if n_in != n_out:
        params["wt"] = jax.random.normal(k3, (n_in, n_out), jnp.float32) / jnp.sqrt(n_in)
        params["gt"] = jnp.ones((SEQ, n_out), jnp.float32)
        params["bt"] = jnp.zeros((SEQ, n_out), jnp.float32)
    return params


@functools.partial(jax.jit, static_argnames=("compute_dtype",))
def linear_res_forward(x, params, compute_dtype=jnp.float32):
    B, S, n_in = x.shape
    assert S == SEQ, "LinearRes uses LayerNorm([20, n_out]); seq dim must be 20"
    n_out = params["w1"].shape[1]
    has_transform = "wt" in params

    # --- batch tile selection -------------------------------------------------
    # tile_b samples (tile_b*SEQ matmul rows) per grid step.  tile_b even keeps
    # R a multiple of 8 whenever the grid has >1 step; a batch that fits in one
    # step collapses to a single full-array block (no padding, no slice).
    if B <= _TILE_B_TARGET:
        tile_b, n_blocks = B, 1
    else:
        tile_b = _TILE_B_TARGET
        n_blocks = pl.cdiv(B, tile_b)
    Bp = n_blocks * tile_b
    R = tile_b * SEQ                       # matmul rows per grid step

    xf = x.reshape(B * SEQ, n_in).astype(compute_dtype)
    if Bp != B:
        xf = jnp.pad(xf, ((0, (Bp - B) * SEQ), (0, 0)))   # zero samples; sliced off

    def tile_param(p):  # (SEQ, n_out) -> (R, n_out), one copy per sample in a tile
        return jnp.tile(p.astype(jnp.float32), (tile_b, 1))

    def const_spec(shape):  # revisited every step: DMA'd once, single-buffered
        return pl.BlockSpec(shape, lambda i: (0,) * len(shape),
                            pipeline_mode=pl.Buffered(1))

    if has_transform:
        kernel = _kernel_transform
        gb = jnp.stack([tile_param(params["g1"]), tile_param(params["b1"]),
                        tile_param(params["g2"]), tile_param(params["b2"]),
                        tile_param(params["gt"]), tile_param(params["bt"])])
        weights = (params["w1"].astype(compute_dtype),
                   params["wt"].astype(compute_dtype),
                   params["w2"].astype(compute_dtype))
        w_specs = [const_spec((n_in, n_out)),
                   const_spec((n_in, n_out)),
                   const_spec((n_out, n_out))]
    else:
        kernel = _kernel_identity
        gb = jnp.stack([tile_param(params["g1"]), tile_param(params["b1"]),
                        tile_param(params["g2"]), tile_param(params["b2"])])
        weights = (params["w1"].astype(compute_dtype),
                   params["w2"].astype(compute_dtype))
        w_specs = [const_spec((n_in, n_out)),
                   const_spec((n_out, n_out))]

    in_specs = ([pl.BlockSpec((R, n_in), lambda i: (i, 0))]
                + w_specs
                + [const_spec((gb.shape[0], R, n_out))])
    out_spec = pl.BlockSpec((R, n_out), lambda i: (i, 0))

    out_flat = pl.pallas_call(
        kernel,
        out_shape=jax.ShapeDtypeStruct((Bp * SEQ, n_out), jnp.float32),
        grid_spec=pltpu.PrefetchScalarGridSpec(
            num_scalar_prefetch=0,
            grid=(n_blocks,),
            in_specs=in_specs,
            out_specs=out_spec,
        ),
        compiler_params=pltpu.CompilerParams(
            # "parallel": batch blocks are independent.
            # TODO(synk): pltpu.CORE_PARALLEL + even block counts for v7x's two
            # TensorCores, gated on hardware measurement.
            dimension_semantics=("parallel",),
        ),
    )(xf, *weights, gb)

    if Bp != B:
        out_flat = out_flat[: B * SEQ]
    return out_flat.reshape(B, SEQ, n_out)


def linear_res_reference(x, params):
    """Pure-JAX reference mirroring the torch forward, for verification."""
    def ln(h, g, b):
        mu = jnp.mean(h, axis=(-2, -1), keepdims=True)
        var = jnp.mean((h - mu) ** 2, axis=(-2, -1), keepdims=True)
        return (h - mu) / jnp.sqrt(var + LN_EPS) * g + b

    def mm(a, w):
        return jnp.einsum("bsi,io->bso", a, w, precision="highest")

    out = ln(mm(x, params["w1"]), params["g1"], params["b1"])
    out = jnp.maximum(out, 0.0)
    out = ln(mm(out, params["w2"]), params["g2"], params["b2"])
    if "wt" in params:
        res = ln(mm(x, params["wt"]), params["gt"], params["bt"])
    else:
        res = x
    return jnp.maximum(out + res, 0.0)


if __name__ == "__main__":
    key = jax.random.PRNGKey(0)
    kx, kp, kx2, kp2 = jax.random.split(key, 4)

    # --- transform branch (n_in != n_out), single-block grid: f32 and bf16 ----
    B, n_in, n_out = 2, 16, 32
    x = jax.random.normal(kx, (B, SEQ, n_in), jnp.float32)
    params = init_params(kp, n_in, n_out)

    out_f32 = jax.block_until_ready(linear_res_forward(x, params))
    ref = linear_res_reference(x, params)
    assert out_f32.shape == (B, SEQ, n_out)
    assert jnp.allclose(out_f32, ref, atol=1e-3, rtol=1e-3), "f32 transform mismatch"

    out_bf16 = jax.block_until_ready(
        linear_res_forward(x, params, compute_dtype=jnp.bfloat16))
    assert jnp.allclose(out_bf16, ref, atol=1e-1, rtol=1e-1), "bf16 transform mismatch"

    # --- identity branch (n_in == n_out): multi-step grid + batch padding -----
    B2, n2 = 45, 32                       # tile_b=32 -> 2 grid steps, 19 padded samples
    x2 = jax.random.normal(kx2, (B2, SEQ, n2), jnp.float32)
    params2 = init_params(kp2, n2, n2)
    out2 = jax.block_until_ready(linear_res_forward(x2, params2))
    ref2 = linear_res_reference(x2, params2)
    assert out2.shape == (B2, SEQ, n2)
    assert jnp.allclose(out2, ref2, atol=1e-3, rtol=1e-3), "identity branch mismatch"

    print("KERNEL_OK")
</pallas_src>

<mosaic_0001>
module attributes {stable_mosaic.version = 11 : i64} {
  func.func @_kernel_transform(%arg0: i32, %arg1: memref<40x16xf32, #tpu.memory_space<vmem>>, %arg2: memref<16x32xf32, #tpu.memory_space<vmem>>, %arg3: memref<16x32xf32, #tpu.memory_space<vmem>>, %arg4: memref<32x32xf32, #tpu.memory_space<vmem>>, %arg5: memref<6x40x32xf32, #tpu.memory_space<vmem>>, %arg6: memref<40x32xf32, #tpu.memory_space<vmem>>) attributes {dimension_semantics = [#tpu.dimension_semantics<parallel>], iteration_bounds = array<i64: 1>, scalar_prefetch = 0 : i64, scratch_operands = 0 : i64, tpu.core_type = #tpu.core_type<tc>, window_params = [{transform_indices = @transform_0, window_bounds = array<i64: 40, 16>}, {pipeline_mode = #tpu.pipeline_mode<synchronous>, transform_indices = @transform_1, window_bounds = array<i64: 16, 32>}, {pipeline_mode = #tpu.pipeline_mode<synchronous>, transform_indices = @transform_2, window_bounds = array<i64: 16, 32>}, {pipeline_mode = #tpu.pipeline_mode<synchronous>, transform_indices = @transform_3, window_bounds = array<i64: 32, 32>}, {pipeline_mode = #tpu.pipeline_mode<synchronous>, transform_indices = @transform_4, window_bounds = array<i64: 6, 40, 32>}, {transform_indices = @transform_5, window_bounds = array<i64: 40, 32>}]} {
    %c0 = arith.constant 0 : index
    %c0_0 = arith.constant 0 : index
    %0 = vector.load %arg1[%c0, %c0_0] : memref<40x16xf32, #tpu.memory_space<vmem>>, vector<40x16xf32>
    %1 = tpu.iota {dimensions = array<i32: 1>} : vector<2x40xi32>
    %2 = tpu.iota {dimensions = array<i32: 0>} : vector<2x40xi32>
    %c20_i32 = arith.constant 20 : i32
    %3 = vector.broadcast %c20_i32 : i32 to vector<2x40xi32>
    %4 = arith.muli %2, %3 : vector<2x40xi32>
    %5 = arith.cmpi sge, %1, %4 : vector<2x40xi32>
    %c20_i32_1 = arith.constant 20 : i32
    %6 = vector.broadcast %c20_i32_1 : i32 to vector<2x40xi32>
    %7 = arith.addi %4, %6 : vector<2x40xi32>
    %8 = arith.cmpi slt, %1, %7 : vector<2x40xi32>
    %9 = arith.andi %5, %8 : vector<2x40xi1>
    %10 = arith.extui %9 : vector<2x40xi1> to vector<2x40xi32>
    %11 = arith.sitofp %10 : vector<2x40xi32> to vector<2x40xf32>
    %12 = tpu.iota {dimensions = array<i32: 0>} : vector<40x2xi32>
    %13 = tpu.iota {dimensions = array<i32: 1>} : vector<40x2xi32>
    %c20_i32_2 = arith.constant 20 : i32
    %14 = vector.broadcast %c20_i32_2 : i32 to vector<40x2xi32>
    %15 = arith.muli %13, %14 : vector<40x2xi32>
    %16 = arith.cmpi sge, %12, %15 : vector<40x2xi32>
    %c20_i32_3 = arith.constant 20 : i32
    %17 = vector.broadcast %c20_i32_3 : i32 to vector<40x2xi32>
    %18 = arith.addi %15, %17 : vector<40x2xi32>
    %19 = arith.cmpi slt, %12, %18 : vector<40x2xi32>
    %20 = arith.andi %16, %19 : vector<40x2xi1>
    %21 = arith.extui %20 : vector<40x2xi1> to vector<40x2xi32>
    %22 = arith.sitofp %21 : vector<40x2xi32> to vector<40x2xf32>
    %c0_4 = arith.constant 0 : index
    %c0_5 = arith.constant 0 : index
    %23 = vector.load %arg2[%c0_4, %c0_5] : memref<16x32xf32, #tpu.memory_space<vmem>>, vector<16x32xf32>
    %cst = arith.constant dense<0.000000e+00> : vector<40x32xf32>
    %24 = tpu.matmul %0, %23, %cst {dimension_numbers = #tpu.dot_dimension_numbers<[1], [0], [0], [1], [0, 0, 1, 1], [], []>} : vector<40x16xf32>, vector<16x32xf32>, vector<40x32xf32> -> vector<40x32xf32>
    %c0_6 = arith.constant 0 : index
    %c0_7 = arith.constant 0 : index
    %c0_8 = arith.constant 0 : index
    %25 = vector.load %arg5[%c0_6, %c0_7, %c0_8] : memref<6x40x32xf32, #tpu.memory_space<vmem>>, vector<1x40x32xf32>
    %26 = vector.shape_cast %25 : vector<1x40x32xf32> to vector<40x32xf32>
    %c1 = arith.constant 1 : index
    %c0_9 = arith.constant 0 : index
    %c0_10 = arith.constant 0 : index
    %27 = vector.load %arg5[%c1, %c0_9, %c0_10] : memref<6x40x32xf32, #tpu.memory_space<vmem>>, vector<1x40x32xf32>
    %28 = vector.shape_cast %27 : vector<1x40x32xf32> to vector<40x32xf32>
    %cst_11 = arith.constant dense<0.000000e+00> : vector<40xf32>
    %29 = vector.multi_reduction <add>, %24, %cst_11 [1] : vector<40x32xf32> to vector<40xf32>
    %30 = vector.shape_cast %29 : vector<40xf32> to vector<40x1xf32>
    %31 = vector.shape_cast %30 : vector<40x1xf32> to vector<1x40x1xf32>
    %cst_12 = arith.constant dense<0.000000e+00> : vector<1xf32>
    %32 = vector.multi_reduction <add>, %31, %cst_12 [1, 2] : vector<1x40x1xf32> to vector<1xf32>
    %33 = vector.shape_cast %32 : vector<1xf32> to vector<1x1x1xf32>
    %34 = vector.extract %33[0, 0, 0] : f32 from vector<1x1x1xf32>
    %cst_13 = arith.constant 7.812500e-04 : f32
    %35 = arith.mulf %34, %cst_13 : f32
    %36 = vector.broadcast %35 : f32 to vector<40x32xf32>
    %37 = arith.subf %24, %36 : vector<40x32xf32>
    %cst_14 = arith.constant 3.200000e+01 : f32
    %38 = arith.mulf %cst_14, %35 : f32
    %39 = vector.broadcast %38 : f32 to vector<40x1xf32>
    %40 = arith.subf %30, %39 : vector<40x1xf32>
    %41 = arith.mulf %37, %37 : vector<40x32xf32>
    %cst_15 = arith.constant dense<0.000000e+00> : vector<40xf32>
    %42 = vector.multi_reduction <add>, %41, %cst_15 [1] : vector<40x32xf32> to vector<40xf32>
    %43 = vector.shape_cast %42 : vector<40xf32> to vector<40x1xf32>
    %44 = tpu.concatenate %40, %43 in 1 : vector<40x1xf32>, vector<40x1xf32> -> vector<40x2xf32>
    %cst_16 = arith.constant dense<0.000000e+00> : vector<2x2xf32>
    %45 = tpu.matmul %11, %44, %cst_16 {dimension_numbers = #tpu.dot_dimension_numbers<[1], [0], [0], [1], [0, 0, 1, 1], [], []>} : vector<2x40xf32>, vector<40x2xf32>, vector<2x2xf32> -> vector<2x2xf32>
    %cst_17 = arith.constant 1.562500e-03 : f32
    %46 = vector.broadcast %cst_17 : f32 to vector<2x2xf32>
    %47 = arith.mulf %45, %46 : vector<2x2xf32>
    %48 = vector.extract_strided_slice %47 {offsets = [0, 0], sizes = [2, 1], strides = [1, 1]} : vector<2x2xf32> to vector<2x1xf32>
    %49 = vector.extract_strided_slice %47 {offsets = [0, 1], sizes = [2, 1], strides = [1, 1]} : vector<2x2xf32> to vector<2x1xf32>
    %50 = arith.mulf %48, %48 : vector<2x1xf32>
    %51 = arith.subf %49, %50 : vector<2x1xf32>
    %cst_18 = arith.constant 9.99999974E-6 : f32
    %52 = vector.broadcast %cst_18 : f32 to vector<2x1xf32>
    %53 = arith.addf %51, %52 : vector<2x1xf32>
    %54 = math.rsqrt %53 : vector<2x1xf32>
    %55 = tpu.concatenate %48, %54 in 1 : vector<2x1xf32>, vector<2x1xf32> -> vector<2x2xf32>
    %cst_19 = arith.constant dense<0.000000e+00> : vector<40x2xf32>
    %56 = tpu.matmul %22, %55, %cst_19 {dimension_numbers = #tpu.dot_dimension_numbers<[1], [0], [0], [1], [0, 0, 1, 1], [], []>} : vector<40x2xf32>, vector<2x2xf32>, vector<40x2xf32> -> vector<40x2xf32>
    %57 = vector.extract_strided_slice %56 {offsets = [0, 0], sizes = [40, 1], strides = [1, 1]} : vector<40x2xf32> to vector<40x1xf32>
    %58 = vector.broadcast %57 : vector<40x1xf32> to vector<40x32xf32>
    %59 = arith.subf %37, %58 : vector<40x32xf32>
    %60 = vector.extract_strided_slice %56 {offsets = [0, 1], sizes = [40, 1], strides = [1, 1]} : vector<40x2xf32> to vector<40x1xf32>
    %61 = vector.broadcast %60 : vector<40x1xf32> to vector<40x32xf32>
    %62 = arith.mulf %59, %61 : vector<40x32xf32>
    %63 = arith.mulf %62, %26 : vector<40x32xf32>
    %64 = arith.addf %63, %28 : vector<40x32xf32>
    %cst_20 = arith.constant 0.000000e+00 : f32
    %65 = vector.broadcast %cst_20 : f32 to vector<40x32xf32>
    %66 = arith.maximumf %64, %65 : vector<40x32xf32>
    %c0_21 = arith.constant 0 : index
    %c0_22 = arith.constant 0 : index
    %67 = vector.load %arg4[%c0_21, %c0_22] : memref<32x32xf32, #tpu.memory_space<vmem>>, vector<32x32xf32>
    %cst_23 = arith.constant dense<0.000000e+00> : vector<40x32xf32>
    %68 = tpu.matmul %66, %67, %cst_23 {dimension_numbers = #tpu.dot_dimension_numbers<[1], [0], [0], [1], [0, 0, 1, 1], [], []>} : vector<40x32xf32>, vector<32x32xf32>, vector<40x32xf32> -> vector<40x32xf32>
    %c2 = arith.constant 2 : index
    %c0_24 = arith.constant 0 : index
    %c0_25 = arith.constant 0 : index
    %69 = vector.load %arg5[%c2, %c0_24, %c0_25] : memref<6x40x32xf32, #tpu.memory_space<vmem>>, vector<1x40x32xf32>
    %70 = vector.shape_cast %69 : vector<1x40x32xf32> to vector<40x32xf32>
    %c3 = arith.constant 3 : index
    %c0_26 = arith.constant 0 : index
    %c0_27 = arith.constant 0 : index
    %71 = vector.load %arg5[%c3, %c0_26, %c0_27] : memref<6x40x32xf32, #tpu.memory_space<vmem>>, vector<1x40x32xf32>
    %72 = vector.shape_cast %71 : vector<1x40x32xf32> to vector<40x32xf32>
    %cst_28 = arith.constant dense<0.000000e+00> : vector<40xf32>
    %73 = vector.multi_reduction <add>, %68, %cst_28 [1] : vector<40x32xf32> to vector<40xf32>
    %74 = vector.shape_cast %73 : vector<40xf32> to vector<40x1xf32>
    %75 = vector.shape_cast %74 : vector<40x1xf32> to vector<1x40x1xf32>
    %cst_29 = arith.constant dense<0.000000e+00> : vector<1xf32>
    %76 = vector.multi_reduction <add>, %75, %cst_29 [1, 2] : vector<1x40x1xf32> to vector<1xf32>
    %77 = vector.shape_cast %76 : vector<1xf32> to vector<1x1x1xf32>
    %78 = vector.extract %77[0, 0, 0] : f32 from vector<1x1x1xf32>
    %cst_30 = arith.constant 7.812500e-04 : f32
    %79 = arith.mulf %78, %cst_30 : f32
    %80 = vector.broadcast %79 : f32 to vector<40x32xf32>
    %81 = arith.subf %68, %80 : vector<40x32xf32>
    %cst_31 = arith.constant 3.200000e+01 : f32
    %82 = arith.mulf %cst_31, %79 : f32
    %83 = vector.broadcast %82 : f32 to vector<40x1xf32>
    %84 = arith.subf %74, %83 : vector<40x1xf32>
    %85 = arith.mulf %81, %81 : vector<40x32xf32>
    %cst_32 = arith.constant dense<0.000000e+00> : vector<40xf32>
    %86 = vector.multi_reduction <add>, %85, %cst_32 [1] : vector<40x32xf32> to vector<40xf32>
    %87 = vector.shape_cast %86 : vector<40xf32> to vector<40x1xf32>
    %88 = tpu.concatenate %84, %87 in 1 : vector<40x1xf32>, vector<40x1xf32> -> vector<40x2xf32>
    %cst_33 = arith.constant dense<0.000000e+00> : vector<2x2xf32>
    %89 = tpu.matmul %11, %88, %cst_33 {dimension_numbers = #tpu.dot_dimension_numbers<[1], [0], [0], [1], [0, 0, 1, 1], [], []>} : vector<2x40xf32>, vector<40x2xf32>, vector<2x2xf32> -> vector<2x2xf32>
    %cst_34 = arith.constant 1.562500e-03 : f32
    %90 = vector.broadcast %cst_34 : f32 to vector<2x2xf32>
    %91 = arith.mulf %89, %90 : vector<2x2xf32>
    %92 = vector.extract_strided_slice %91 {offsets = [0, 0], sizes = [2, 1], strides = [1, 1]} : vector<2x2xf32> to vector<2x1xf32>
    %93 = vector.extract_strided_slice %91 {offsets = [0, 1], sizes = [2, 1], strides = [1, 1]} : vector<2x2xf32> to vector<2x1xf32>
    %94 = arith.mulf %92, %92 : vector<2x1xf32>
    %95 = arith.subf %93, %94 : vector<2x1xf32>
    %cst_35 = arith.constant 9.99999974E-6 : f32
    %96 = vector.broadcast %cst_35 : f32 to vector<2x1xf32>
    %97 = arith.addf %95, %96 : vector<2x1xf32>
    %98 = math.rsqrt %97 : vector<2x1xf32>
    %99 = tpu.concatenate %92, %98 in 1 : vector<2x1xf32>, vector<2x1xf32> -> vector<2x2xf32>
    %cst_36 = arith.constant dense<0.000000e+00> : vector<40x2xf32>
    %100 = tpu.matmul %22, %99, %cst_36 {dimension_numbers = #tpu.dot_dimension_numbers<[1], [0], [0], [1], [0, 0, 1, 1], [], []>} : vector<40x2xf32>, vector<2x2xf32>, vector<40x2xf32> -> vector<40x2xf32>
    %101 = vector.extract_strided_slice %100 {offsets = [0, 0], sizes = [40, 1], strides = [1, 1]} : vector<40x2xf32> to vector<40x1xf32>
    %102 = vector.broadcast %101 : vector<40x1xf32> to vector<40x32xf32>
    %103 = arith.subf %81, %102 : vector<40x32xf32>
    %104 = vector.extract_strided_slice %100 {offsets = [0, 1], sizes = [40, 1], strides = [1, 1]} : vector<40x2xf32> to vector<40x1xf32>
    %105 = vector.broadcast %104 : vector<40x1xf32> to vector<40x32xf32>
    %106 = arith.mulf %103, %105 : vector<40x32xf32>
    %107 = arith.mulf %106, %70 : vector<40x32xf32>
    %108 = arith.addf %107, %72 : vector<40x32xf32>
    %c0_37 = arith.constant 0 : index
    %c0_38 = arith.constant 0 : index
    %109 = vector.load %arg3[%c0_37, %c0_38] : memref<16x32xf32, #tpu.memory_space<vmem>>, vector<16x32xf32>
    %cst_39 = arith.constant dense<0.000000e+00> : vector<40x32xf32>
    %110 = tpu.matmul %0, %109, %cst_39 {dimension_numbers = #tpu.dot_dimension_numbers<[1], [0], [0], [1], [0, 0, 1, 1], [], []>} : vector<40x16xf32>, vector<16x32xf32>, vector<40x32xf32> -> vector<40x32xf32>
    %c4 = arith.constant 4 : index
    %c0_40 = arith.constant 0 : index
    %c0_41 = arith.constant 0 : index
    %111 = vector.load %arg5[%c4, %c0_40, %c0_41] : memref<6x40x32xf32, #tpu.memory_space<vmem>>, vector<1x40x32xf32>
    %112 = vector.shape_cast %111 : vector<1x40x32xf32> to vector<40x32xf32>
    %c5 = arith.constant 5 : index
    %c0_42 = arith.constant 0 : index
    %c0_43 = arith.constant 0 : index
    %113 = vector.load %arg5[%c5, %c0_42, %c0_43] : memref<6x40x32xf32, #tpu.memory_space<vmem>>, vector<1x40x32xf32>
    %114 = vector.shape_cast %113 : vector<1x40x32xf32> to vector<40x32xf32>
    %cst_44 = arith.constant dense<0.000000e+00> : vector<40xf32>
    %115 = vector.multi_reduction <add>, %110, %cst_44 [1] : vector<40x32xf32> to vector<40xf32>
    %116 = vector.shape_cast %115 : vector<40xf32> to vector<40x1xf32>
    %117 = vector.shape_cast %116 : vector<40x1xf32> to vector<1x40x1xf32>
    %cst_45 = arith.constant dense<0.000000e+00> : vector<1xf32>
    %118 = vector.multi_reduction <add>, %117, %cst_45 [1, 2] : vector<1x40x1xf32> to vector<1xf32>
    %119 = vector.shape_cast %118 : vector<1xf32> to vector<1x1x1xf32>
    %120 = vector.extract %119[0, 0, 0] : f32 from vector<1x1x1xf32>
    %cst_46 = arith.constant 7.812500e-04 : f32
    %121 = arith.mulf %120, %cst_46 : f32
    %122 = vector.broadcast %121 : f32 to vector<40x32xf32>
    %123 = arith.subf %110, %122 : vector<40x32xf32>
    %cst_47 = arith.constant 3.200000e+01 : f32
    %124 = arith.mulf %cst_47, %121 : f32
    %125 = vector.broadcast %124 : f32 to vector<40x1xf32>
    %126 = arith.subf %116, %125 : vector<40x1xf32>
    %127 = arith.mulf %123, %123 : vector<40x32xf32>
    %cst_48 = arith.constant dense<0.000000e+00> : vector<40xf32>
    %128 = vector.multi_reduction <add>, %127, %cst_48 [1] : vector<40x32xf32> to vector<40xf32>
    %129 = vector.shape_cast %128 : vector<40xf32> to vector<40x1xf32>
    %130 = tpu.concatenate %126, %129 in 1 : vector<40x1xf32>, vector<40x1xf32> -> vector<40x2xf32>
    %cst_49 = arith.constant dense<0.000000e+00> : vector<2x2xf32>
    %131 = tpu.matmul %11, %130, %cst_49 {dimension_numbers = #tpu.dot_dimension_numbers<[1], [0], [0], [1], [0, 0, 1, 1], [], []>} : vector<2x40xf32>, vector<40x2xf32>, vector<2x2xf32> -> vector<2x2xf32>
    %cst_50 = arith.constant 1.562500e-03 : f32
    %132 = vector.broadcast %cst_50 : f32 to vector<2x2xf32>
    %133 = arith.mulf %131, %132 : vector<2x2xf32>
    %134 = vector.extract_strided_slice %133 {offsets = [0, 0], sizes = [2, 1], strides = [1, 1]} : vector<2x2xf32> to vector<2x1xf32>
    %135 = vector.extract_strided_slice %133 {offsets = [0, 1], sizes = [2, 1], strides = [1, 1]} : vector<2x2xf32> to vector<2x1xf32>
    %136 = arith.mulf %134, %134 : vector<2x1xf32>
    %137 = arith.subf %135, %136 : vector<2x1xf32>
    %cst_51 = arith.constant 9.99999974E-6 : f32
    %138 = vector.broadcast %cst_51 : f32 to vector<2x1xf32>
    %139 = arith.addf %137, %138 : vector<2x1xf32>
    %140 = math.rsqrt %139 : vector<2x1xf32>
    %141 = tpu.concatenate %134, %140 in 1 : vector<2x1xf32>, vector<2x1xf32> -> vector<2x2xf32>
    %cst_52 = arith.constant dense<0.000000e+00> : vector<40x2xf32>
    %142 = tpu.matmul %22, %141, %cst_52 {dimension_numbers = #tpu.dot_dimension_numbers<[1], [0], [0], [1], [0, 0, 1, 1], [], []>} : vector<40x2xf32>, vector<2x2xf32>, vector<40x2xf32> -> vector<40x2xf32>
    %143 = vector.extract_strided_slice %142 {offsets = [0, 0], sizes = [40, 1], strides = [1, 1]} : vector<40x2xf32> to vector<40x1xf32>
    %144 = vector.broadcast %143 : vector<40x1xf32> to vector<40x32xf32>
    %145 = arith.subf %123, %144 : vector<40x32xf32>
    %146 = vector.extract_strided_slice %142 {offsets = [0, 1], sizes = [40, 1], strides = [1, 1]} : vector<40x2xf32> to vector<40x1xf32>
    %147 = vector.broadcast %146 : vector<40x1xf32> to vector<40x32xf32>
    %148 = arith.mulf %145, %147 : vector<40x32xf32>
    %149 = arith.mulf %148, %112 : vector<40x32xf32>
    %150 = arith.addf %149, %114 : vector<40x32xf32>
    %151 = arith.addf %108, %150 : vector<40x32xf32>
    %cst_53 = arith.constant 0.000000e+00 : f32
    %152 = vector.broadcast %cst_53 : f32 to vector<40x32xf32>
    %153 = arith.maximumf %151, %152 : vector<40x32xf32>
    %c0_54 = arith.constant 0 : index
    %c0_55 = arith.constant 0 : index
    %154 = vector.load %arg6[%c0_54, %c0_55] : memref<40x32xf32, #tpu.memory_space<vmem>>, vector<40x32xf32>
    tpu.vector_store %arg6[%c0_54, %c0_55], %153 {strides = array<i32>} : memref<40x32xf32, #tpu.memory_space<vmem>>, vector<40x32xf32>,
    return
  }
  func.func @transform_0(%arg0: i32) -> (i32, i32) {
    %c0_i32 = arith.constant 0 : i32
    %c0_i32_0 = arith.constant 0 : i32
    return %arg0, %c0_i32 : i32, i32
  }
  func.func @transform_1(%arg0: i32) -> (i32, i32) {
    %c0_i32 = arith.constant 0 : i32
    %c0_i32_0 = arith.constant 0 : i32
    %c0_i32_1 = arith.constant 0 : i32
    return %c0_i32, %c0_i32_0 : i32, i32
  }
  func.func @transform_2(%arg0: i32) -> (i32, i32) {
    %c0_i32 = arith.constant 0 : i32
    %c0_i32_0 = arith.constant 0 : i32
    %c0_i32_1 = arith.constant 0 : i32
    return %c0_i32, %c0_i32_0 : i32, i32
  }
  func.func @transform_3(%arg0: i32) -> (i32, i32) {
    %c0_i32 = arith.constant 0 : i32
    %c0_i32_0 = arith.constant 0 : i32
    %c0_i32_1 = arith.constant 0 : i32
    return %c0_i32, %c0_i32_0 : i32, i32
  }
  func.func @transform_4(%arg0: i32) -> (i32, i32, i32) {
    %c0_i32 = arith.constant 0 : i32
    %c0_i32_0 = arith.constant 0 : i32
    %c0_i32_1 = arith.constant 0 : i32
    %c0_i32_2 = arith.constant 0 : i32
    return %c0_i32, %c0_i32_0, %c0_i32_1 : i32, i32, i32
  }
  func.func @transform_5(%arg0: i32) -> (i32, i32) {
    %c0_i32 = arith.constant 0 : i32
    %c0_i32_0 = arith.constant 0 : i32
    return %arg0, %c0_i32 : i32, i32
  }
}

</mosaic_0001>

<llo_original>
// kernel: linear_res_forward.1
$region0: #{linear_res_forward.1}
  #allocation0 [shape = 'u32[]', space=smem, size = 0x4, offset = 0x4, fixed_abs, tag = 'smem constant byte address 0x4 - core index']
  #allocation1 [shape = 'u32[144,128]{1,0:T(1,128)}', space=vmem, size = 0x12000, scoped, tag = 'internal scratch']
  %s0 = inlined_call_operand.vmem [shape: f32[40,16], index: 0, kind: input, shape index: {}]
  %s1 = inlined_call_operand.vmem [shape: f32[16,32], index: 1, kind: input, shape index: {}]
  %s2 = inlined_call_operand.vmem [shape: f32[16,32], index: 2, kind: input, shape index: {}]
  %s3 = inlined_call_operand.vmem [shape: f32[32,32], index: 3, kind: input, shape index: {}]
  %s4 = inlined_call_operand.vmem [shape: f32[6,40,32], index: 4, kind: input, shape index: {}]
  %s5 = inlined_call_operand.vmem [shape: f32[40,32], index: 5, kind: output, shape index: {}]
  %s6 = sld [smem:[#allocation0]]
  $region30: #{linear_res_forward.1} parent=0
    _
  %s8 = ssub.s32 1, %s6
  %s9 = scalar_select 0, %s8, %s6
  // Predicated region
  $region2: #{linear_res_forward.1} parent=0 // pred_check
    _
  $region3: #{linear_res_forward.1} parent=0 // pred_check_branch
    %11 = sbr.rel (0) target = $region5
  $region4: #{linear_res_forward.1} parent=0 // pred_region
    _
  $region5: #{linear_res_forward.1} parent=0 // pred_fallthru
    _
  // Predicated region
  $region6: #{linear_res_forward.1} parent=0 // pred_check
    _
  $region7: #{linear_res_forward.1} parent=0 // pred_check_branch
    %13 = sbr.rel (0) target = $region9
  $region8: #{linear_res_forward.1} parent=0 // pred_region
    _
  $region9: #{linear_res_forward.1} parent=0 // pred_fallthru
    _
  // Predicated region
  $region10: #{linear_res_forward.1} parent=0 // pred_check
    _
  $region11: #{linear_res_forward.1} parent=0 // pred_check_branch
    %15 = sbr.rel (0) target = $region13
  $region12: #{linear_res_forward.1} parent=0 // pred_region
    _
  $region13: #{linear_res_forward.1} parent=0 // pred_fallthru
    _
  // Predicated region
  $region14: #{linear_res_forward.1} parent=0 // pred_check
    _
  $region15: #{linear_res_forward.1} parent=0 // pred_check_branch
    %17 = sbr.rel (0) target = $region17
  $region16: #{linear_res_forward.1} parent=0 // pred_region
    _
  $region17: #{linear_res_forward.1} parent=0 // pred_fallthru
    _
  // Predicated region
  $region18: #{linear_res_forward.1} parent=0 // pred_check
    _
  $region19: #{linear_res_forward.1} parent=0 // pred_check_branch
    %19 = sbr.rel (0) target = $region21
  $region20: #{linear_res_forward.1} parent=0 // pred_region
    _
  $region21: #{linear_res_forward.1} parent=0 // pred_fallthru
    _
  %v20 = vld [vmem:[%s0] sm:$0xff]
  %v21 = vld [vmem:[%s0 + $0x8] sm:$0xff]
  %v22 = vld [vmem:[%s0 + $0x10] sm:$0xff]
  %v23 = vld [vmem:[%s0 + $0x18] sm:$0xff]
  %v24 = vld [vmem:[%s0 + $0x20] sm:$0xff]
  %v25 = vlaneseq
  %v26 = vand.u32 %v25, 127
  %v27 = vlaneseq
  %v28 = vshrl.u32 %v27, 7
  %v29 = vmul.u32 %v28, 20
  %vm30 = vcmp.ge.s32.totalorder %v26, %v29
  %v31 = vadd.s32 %v29, 20
  %vm32 = vcmp.lt.s32.totalorder %v26, %v31
  %vm33 = vmand %vm30, %vm32
  %v34 = vsel %vm33, 1, 0
  %v35 = vcvt.s32.f32 %v34
  %v36 = vadd.s32 %v28, 8
  %v37 = vadd.s32 %v28, 16
  %v38 = vadd.s32 %v28, 24
  %v39 = vadd.s32 %v28, 32
  %v40 = vmul.u32 %v26, 20
  %vm41 = vcmp.ge.s32.totalorder %v28, %v40
  %vm42 = vcmp.ge.s32.totalorder %v36, %v40
  %vm43 = vcmp.ge.s32.totalorder %v37, %v40
  %vm44 = vcmp.ge.s32.totalorder %v38, %v40
  %vm45 = vcmp.ge.s32.totalorder %v39, %v40
  %v46 = vadd.s32 %v40, 20
  %vm47 = vcmp.lt.s32.totalorder %v28, %v46
  %vm48 = vcmp.lt.s32.totalorder %v36, %v46
  %vm49 = vcmp.lt.s32.totalorder %v37, %v46
  %vm50 = vcmp.lt.s32.totalorder %v38, %v46
  %vm51 = vcmp.lt.s32.totalorder %v39, %v46
  %vm52 = vmand %vm41, %vm47
  %vm53 = vmand %vm42, %vm48
  %vm54 = vmand %vm43, %vm49
  %vm55 = vmand %vm44, %vm50
  %vm56 = vmand %vm45, %vm51
  %v57 = vsel %vm52, 1, 0
  %v58 = vsel %vm53, 1, 0
  %v59 = vsel %vm54, 1, 0
  %v60 = vsel %vm55, 1, 0
  %v61 = vsel %vm56, 1, 0
  %v62 = vcvt.s32.f32 %v57
  %v63 = vcvt.s32.f32 %v58
  %v64 = vcvt.s32.f32 %v59
  %v65 = vcvt.s32.f32 %v60
  %v66 = vcvt.s32.f32 %v61
  %v67 = vld [vmem:[%s1] sm:$0xff]
  %v68 = vld [vmem:[%s1 + $0x8] sm:$0xff]
  %vm69 = vcmask 130048
  %v71 = vsel %vm69, %v20, 0
  %v74 = vsel %vm69, %v21, 0
  %v77 = vsel %vm69, %v22, 0
  %v80 = vsel %vm69, %v23, 0
  %v83 = vsel %vm69, %v24, 0
  %85 = vmatprep.subr.mxu0 0.0
  %86 = vmatpush1.msra.mxu0 0.0
  %87 = vmatprep.subr.mxu0 0.0
  %88 = vmatpush1.msra.mxu0 0.0
  %89 = vmatprep.subr.mxu0 0.0
  %90 = vmatpush1.msra.mxu0 0.0
  %91 = vmatprep.subr.mxu0 0.0
  %92 = vmatpush1.msra.mxu0 0.0
  %93 = vmatprep.subr.mxu0 0.0
  %94 = vmatpush1.msra.mxu0 0.0
  %95 = vmatprep.subr.mxu0 0.0
  %96 = vmatpush1.msra.mxu0 0.0
  %97 = vmatprep.subr.mxu0 0.0
  %98 = vmatpush1.msra.mxu0 0.0
  %99 = vmatprep.subr.mxu0 0.0
  %100 = vmatpush1.msra.mxu0 0.0
  %101 = vmatprep.subr.mxu0 0.0
  %102 = vmatpush1.msra.mxu0 0.0
  %103 = vmatprep.subr.mxu0 0.0
  %104 = vmatpush1.msra.mxu0 0.0
  %105 = vmatprep.subr.mxu0 0.0
  %106 = vmatpush1.msra.mxu0 0.0
  %107 = vmatprep.subr.mxu0 0.0
  %108 = vmatpush1.msra.mxu0 0.0
  %109 = vmatprep.subr.mxu0 0.0
  %110 = vmatpush1.msra.mxu0 0.0
  %111 = vmatprep.subr.mxu0 0.0
  %112 = vmatpush1.msra.mxu0 0.0
  %113 = vmatprep.subr.mxu0 0.0
  %114 = vmatpush1.msra.mxu0 %v68
  %115 = vmatprep.subr.mxu0 0.0
  %116 = vmatpush1.msra.mxu0 %v67
  %117 = vmatprep.subr.mxu0 0.0
  %118 = vmatpush2.msra.mxu0 0.0
  %119 = vmatprep.subr.mxu0 0.0
  %120 = vmatpush2.msra.mxu0 0.0
  %121 = vmatprep.subr.mxu0 0.0
  %122 = vmatpush2.msra.mxu0 0.0
  %123 = vmatprep.subr.mxu0 0.0
  %124 = vmatpush2.msra.mxu0 0.0
  %125 = vmatprep.subr.mxu0 0.0
  %126 = vmatpush2.msra.mxu0 0.0
  %127 = vmatprep.subr.mxu0 0.0
  %128 = vmatpush2.msra.mxu0 0.0
  %129 = vmatprep.subr.mxu0 0.0
  %130 = vmatpush2.msra.mxu0 0.0
  %131 = vmatprep.subr.mxu0 0.0
  %132 = vmatpush2.msra.mxu0 0.0
  %133 = vmatprep.subr.mxu0 0.0
  %134 = vmatpush2.msra.mxu0 0.0
  %135 = vmatprep.subr.mxu0 0.0
  %136 = vmatpush2.msra.mxu0 0.0
  %137 = vmatprep.subr.mxu0 0.0
  %138 = vmatpush2.msra.mxu0 0.0
  %139 = vmatprep.subr.mxu0 0.0
  %140 = vmatpush2.msra.mxu0 0.0
  %141 = vmatprep.subr.mxu0 0.0
  %142 = vmatpush2.msra.mxu0 0.0
  %143 = vmatprep.subr.mxu0 0.0
  %144 = vmatpush2.msra.mxu0 0.0
  %145 = vmatprep.subr.mxu0 0.0
  %146 = vmatpush2.msra.mxu0 0.0
  %147 = vmatprep.subr.mxu0 0.0
  %148 = vmatpush2.msra.mxu0 0.0
  %149 = vmatprep.mubr.f32.mxu0 0.0
  %150 = vmatmul.mubr.f32.gmra.mxu0 %v71
  %v151 = vpop.f32.mrf.mxu0
  %v152 = vadd.f32 0.0, %v151
  %v153 = vpop.f32.mrf.mxu0
  %154 = vmatprep.mubr.f32.mxu0 0.0
  %155 = vmatmul.mubr.f32.gmra.mxu0 %v74
  %v156 = vpop.f32.mrf.mxu0
  %v157 = vadd.f32 0.0, %v156
  %v158 = vpop.f32.mrf.mxu0
  %159 = vmatprep.mubr.f32.mxu0 0.0
  %160 = vmatmul.mubr.f32.gmra.mxu0 %v77
  %v161 = vpop.f32.mrf.mxu0
  %v162 = vadd.f32 0.0, %v161
  %v163 = vpop.f32.mrf.mxu0
  %164 = vmatprep.mubr.f32.mxu0 0.0
  %165 = vmatmul.mubr.f32.gmra.mxu0 %v80
  %v166 = vpop.f32.mrf.mxu0
  %v167 = vadd.f32 0.0, %v166
  %v168 = vpop.f32.mrf.mxu0
  %169 = vmatprep.mubr.f32.mxu0 0.0
  %170 = vmatmul.mubr.f32.gmra.mxu0 %v83
  %v171 = vpop.f32.mrf.mxu0
  %v172 = vadd.f32 0.0, %v171
  %v173 = vpop.f32.mrf.mxu0
  %174 = vdwg.mxu0
  %v175 = vld [vmem:[%s4] sm:$0xff]
  %v176 = vld [vmem:[%s4 + $0x8] sm:$0xff]
  %v177 = vld [vmem:[%s4 + $0x10] sm:$0xff]
  %v178 = vld [vmem:[%s4 + $0x18] sm:$0xff]
  %v179 = vld [vmem:[%s4 + $0x20] sm:$0xff]
  %s180 = scalar_lea.vmem %s4, 40
  %v181 = vld [vmem:[%s180] sm:$0xff]
  %v182 = vld [vmem:[%s180 + $0x8] sm:$0xff]
  %v183 = vld [vmem:[%s180 + $0x10] sm:$0xff]
  %v184 = vld [vmem:[%s180 + $0x18] sm:$0xff]
  %v185 = vld [vmem:[%s180 + $0x20] sm:$0xff]
  %vm186 = vcmask 261120
  %v187 = vsel %vm186, %v152, 0.0
  %188 = vadd.xlane.f32.xlu0 %v187
  %v189 = vpop.xlane.xlu0 %188
  %v190 = vsel %vm186, %v157, 0.0
  %191 = vadd.xlane.f32.xlu0 %v190
  %v192 = vpop.xlane.xlu0 %191
  %v193 = vsel %vm186, %v162, 0.0
  %194 = vadd.xlane.f32.xlu0 %v193
  %v195 = vpop.xlane.xlu0 %194
  %v196 = vsel %vm186, %v167, 0.0
  %197 = vadd.xlane.f32.xlu0 %v196
  %v198 = vpop.xlane.xlu0 %197
  %v199 = vsel %vm186, %v172, 0.0
  %200 = vadd.xlane.f32.xlu0 %v199
  %v201 = vpop.xlane.xlu0 %200
  %vm202 = vcmask 7168
  %v203 = vsel %vm202, %v189, 0.0
  %v204 = vsel %vm202, %v192, 0.0
  %v205 = vadd.f32 %v203, %v204
  %v206 = vsel %vm202, %v195, 0.0
  %v207 = vadd.f32 %v205, %v206
  %v208 = vsel %vm202, %v198, 0.0
  %v209 = vadd.f32 %v207, %v208
  %v210 = vsel %vm202, %v201, 0.0
  %v211 = vadd.f32 %v209, %v210
  %212 = vadd.xlane.f32.xlu0 %v211
  %v213 = vpop.xlane.xlu0 %212
  %v214 = vrot.slane %v213, 4
  %v215 = vadd.f32 %v213, %v214
  %v216 = vrot.slane %v215, 2
  %v217 = vadd.f32 %v215, %v216
  %v218 = vrot.slane %v217, 1
  %v219 = vadd.f32 %v217, %v218
  %s220 = vtos %v219
  %s221 = smul.f32 %s220, 0.00078125
  %v222 = vstv %s221
  %v223 = vsub.f32 %v152, %v222
  %v224 = vsub.f32 %v157, %v222
  %v225 = vsub.f32 %v162, %v222
  %v226 = vsub.f32 %v167, %v222
  %v227 = vsub.f32 %v172, %v222
  %s228 = smul.f32 %s221, 32.0
  %v229 = vstv %s228
  %v230 = vsub.f32 %v189, %v229
  %v231 = vsub.f32 %v192, %v229
  %v232 = vsub.f32 %v195, %v229
  %v233 = vsub.f32 %v198, %v229
  %v234 = vsub.f32 %v201, %v229
  %v235 = vmul.f32 %v223, %v223
  %v236 = vmul.f32 %v224, %v224
  %v237 = vmul.f32 %v225, %v225
  %v238 = vmul.f32 %v226, %v226
  %v239 = vmul.f32 %v227, %v227
  %v240 = vsel %vm186, %v235, 0.0
  %241 = vadd.xlane.f32.xlu0 %v240
  %v242 = vpop.xlane.xlu0 %241
  %v243 = vsel %vm186, %v236, 0.0
  %244 = vadd.xlane.f32.xlu0 %v243
  %v245 = vpop.xlane.xlu0 %244
  %v246 = vsel %vm186, %v237, 0.0
  %247 = vadd.xlane.f32.xlu0 %v246
  %v248 = vpop.xlane.xlu0 %247
  %v249 = vsel %vm186, %v238, 0.0
  %250 = vadd.xlane.f32.xlu0 %v249
  %v251 = vpop.xlane.xlu0 %250
  %v252 = vsel %vm186, %v239, 0.0
  %253 = vadd.xlane.f32.xlu0 %v252
  %v254 = vpop.xlane.xlu0 %253
  %v255 = vsel %vm202, %v230, %v242
  %v256 = vsel %vm202, %v231, %v245
  %v257 = vsel %vm202, %v232, %v248
  %v258 = vsel %vm202, %v233, %v251
  %v259 = vsel %vm202, %v234, %v254
  %vm260 = vcmask 326656
  %v262 = vsel %vm260, %v35, 0
  %264 = vmatprep.subr.mxu0 0.0
  %265 = vmatpush1.msra.mxu0 0.0
  %266 = vmatprep.subr.mxu0 0.0
  %267 = vmatpush1.msra.mxu0 0.0
  %268 = vmatprep.subr.mxu0 0.0
  %269 = vmatpush1.msra.mxu0 0.0
  %270 = vmatprep.subr.mxu0 0.0
  %271 = vmatpush1.msra.mxu0 0.0
  %272 = vmatprep.subr.mxu0 0.0
  %273 = vmatpush1.msra.mxu0 0.0
  %274 = vmatprep.subr.mxu0 0.0
  %275 = vmatpush1.msra.mxu0 0.0
  %276 = vmatprep.subr.mxu0 0.0
  %277 = vmatpush1.msra.mxu0 0.0
  %278 = vmatprep.subr.mxu0 0.0
  %279 = vmatpush1.msra.mxu0 0.0
  %280 = vmatprep.subr.mxu0 0.0
  %281 = vmatpush1.msra.mxu0 0.0
  %282 = vmatprep.subr.mxu0 0.0
  %283 = vmatpush1.msra.mxu0 0.0
  %284 = vmatprep.subr.mxu0 0.0
  %285 = vmatpush1.msra.mxu0 0.0
  %286 = vmatprep.subr.mxu0 0.0
  %287 = vmatpush1.msra.mxu0 %v259
  %288 = vmatprep.subr.mxu0 0.0
  %289 = vmatpush1.msra.mxu0 %v258
  %290 = vmatprep.subr.mxu0 0.0
  %291 = vmatpush1.msra.mxu0 %v257
  %292 = vmatprep.subr.mxu0 0.0
  %293 = vmatpush1.msra.mxu0 %v256
  %294 = vmatprep.subr.mxu0 0.0
  %295 = vmatpush1.msra.mxu0 %v255
  %296 = vmatprep.subr.mxu0 0.0
  %297 = vmatpush2.msra.mxu0 0.0
  %298 = vmatprep.subr.mxu0 0.0
  %299 = vmatpush2.msra.mxu0 0.0
  %300 = vmatprep.subr.mxu0 0.0
  %301 = vmatpush2.msra.mxu0 0.0
  %302 = vmatprep.subr.mxu0 0.0
  %303 = vmatpush2.msra.mxu0 0.0
  %304 = vmatprep.subr.mxu0 0.0
  %305 = vmatpush2.msra.mxu0 0.0
  %306 = vmatprep.subr.mxu0 0.0
  %307 = vmatpush2.msra.mxu0 0.0
  %308 = vmatprep.subr.mxu0 0.0
  %309 = vmatpush2.msra.mxu0 0.0
  %310 = vmatprep.subr.mxu0 0.0
  %311 = vmatpush2.msra.mxu0 0.0
  %312 = vmatprep.subr.mxu0 0.0
  %313 = vmatpush2.msra.mxu0 0.0
  %314 = vmatprep.subr.mxu0 0.0
  %315 = vmatpush2.msra.mxu0 0.0
  %316 = vmatprep.subr.mxu0 0.0
  %317 = vmatpush2.msra.mxu0 0.0
  %318 = vmatprep.subr.mxu0 0.0
  %319 = vmatpush2.msra.mxu0 0.0
  %320 = vmatprep.subr.mxu0 0.0
  %321 = vmatpush2.msra.mxu0 0.0
  %322 = vmatprep.subr.mxu0 0.0
  %323 = vmatpush2.msra.mxu0 0.0
  %324 = vmatprep.subr.mxu0 0.0
  %325 = vmatpush2.msra.mxu0 0.0
  %326 = vmatprep.subr.mxu0 0.0
  %327 = vmatpush2.msra.mxu0 0.0
  %328 = vmatprep.mubr.f32.mxu0 0.0
  %329 = vmatmul.mubr.f32.gmra.mxu0 %v262
  %v330 = vpop.f32.mrf.mxu0
  %v331 = vadd.f32 0.0, %v330
  %v332 = vpop.f32.mrf.mxu0
  %333 = vdwg.mxu0
  %v334 = vmul.f32 %v331, 0.0015625
  %v335 = vmul.f32 %v334, %v334
  %337 = vrot.lane.b32.xlu0 %v335, 1
  %v338 = vpop.permute.xlu0 %337
  %v340 = vsub.f32 %v334, %v338
  %v341 = vadd.f32 %v340, 1e-05
  %v342 = vrsqrt.pop %v341
  %v343 = vsel %vm202, %v334, %v342
  %vm344 = vcmask 15360
  %v346 = vsel %vm344, %v62, 0
  %v349 = vsel %vm344, %v63, 0
  %v352 = vsel %vm344, %v64, 0
  %v355 = vsel %vm344, %v65, 0
  %v358 = vsel %vm344, %v66, 0
  %vm360 = vcmask 1041408
  %v362 = vsel %vm360, %v343, 0
  %364 = vmatprep.subr.mxu0 0.0
  %365 = vmatpush1.msra.mxu0 0.0
  %366 = vmatprep.subr.mxu0 0.0
  %367 = vmatpush1.msra.mxu0 0.0
  %368 = vmatprep.subr.mxu0 0.0
  %369 = vmatpush1.msra.mxu0 0.0
  %370 = vmatprep.subr.mxu0 0.0
  %371 = vmatpush1.msra.mxu0 0.0
  %372 = vmatprep.subr.mxu0 0.0
  %373 = vmatpush1.msra.mxu0 0.0
  %374 = vmatprep.subr.mxu0 0.0
  %375 = vmatpush1.msra.mxu0 0.0
  %376 = vmatprep.subr.mxu0 0.0
  %377 = vmatpush1.msra.mxu0 0.0
  %378 = vmatprep.subr.mxu0 0.0
  %379 = vmatpush1.msra.mxu0 0.0
  %380 = vmatprep.subr.mxu0 0.0
  %381 = vmatpush1.msra.mxu0 0.0
  %382 = vmatprep.subr.mxu0 0.0
  %383 = vmatpush1.msra.mxu0 0.0
  %384 = vmatprep.subr.mxu0 0.0
  %385 = vmatpush1.msra.mxu0 0.0
  %386 = vmatprep.subr.mxu0 0.0
  %387 = vmatpush1.msra.mxu0 0.0
  %388 = vmatprep.subr.mxu0 0.0
  %389 = vmatpush1.msra.mxu0 0.0
  %390 = vmatprep.subr.mxu0 0.0
  %391 = vmatpush1.msra.mxu0 0.0
  %392 = vmatprep.subr.mxu0 0.0
  %393 = vmatpush1.msra.mxu0 0.0
  %394 = vmatprep.subr.mxu0 0.0
  %395 = vmatpush1.msra.mxu0 %v362
  %396 = vmatprep.subr.mxu0 0.0
  %397 = vmatpush2.msra.mxu0 0.0
  %398 = vmatprep.subr.mxu0 0.0
  %399 = vmatpush2.msra.mxu0 0.0
  %400 = vmatprep.subr.mxu0 0.0
  %401 = vmatpush2.msra.mxu0 0.0
  %402 = vmatprep.subr.mxu0 0.0
  %403 = vmatpush2.msra.mxu0 0.0
  %404 = vmatprep.subr.mxu0 0.0
  %405 = vmatpush2.msra.mxu0 0.0
  %406 = vmatprep.subr.mxu0 0.0
  %407 = vmatpush2.msra.mxu0 0.0
  %408 = vmatprep.subr.mxu0 0.0
  %409 = vmatpush2.msra.mxu0 0.0
  %410 = vmatprep.subr.mxu0 0.0
  %411 = vmatpush2.msra.mxu0 0.0
  %412 = vmatprep.subr.mxu0 0.0
  %413 = vmatpush2.msra.mxu0 0.0
  %414 = vmatprep.subr.mxu0 0.0
  %415 = vmatpush2.msra.mxu0 0.0
  %416 = vmatprep.subr.mxu0 0.0
  %417 = vmatpush2.msra.mxu0 0.0
  %418 = vmatprep.subr.mxu0 0.0
  %419 = vmatpush2.msra.mxu0 0.0
  %420 = vmatprep.subr.mxu0 0.0
  %421 = vmatpush2.msra.mxu0 0.0
  %422 = vmatprep.subr.mxu0 0.0
  %423 = vmatpush2.msra.mxu0 0.0
  %424 = vmatprep.subr.mxu0 0.0
  %425 = vmatpush2.msra.mxu0 0.0
  %426 = vmatprep.subr.mxu0 0.0
  %427 = vmatpush2.msra.mxu0 0.0
  %428 = vmatprep.mubr.f32.mxu0 0.0
  %429 = vmatmul.mubr.f32.gmra.mxu0 %v346
  %v430 = vpop.f32.mrf.mxu0
  %v431 = vadd.f32 0.0, %v430
  %v432 = vpop.f32.mrf.mxu0
  %433 = vmatprep.mubr.f32.mxu0 0.0
  %434 = vmatmul.mubr.f32.gmra.mxu0 %v349
  %v435 = vpop.f32.mrf.mxu0
  %v436 = vadd.f32 0.0, %v435
  %v437 = vpop.f32.mrf.mxu0
  %438 = vmatprep.mubr.f32.mxu0 0.0
  %439 = vmatmul.mubr.f32.gmra.mxu0 %v352
  %v440 = vpop.f32.mrf.mxu0
  %v441 = vadd.f32 0.0, %v440
  %v442 = vpop.f32.mrf.mxu0
  %443 = vmatprep.mubr.f32.mxu0 0.0
  %444 = vmatmul.mubr.f32.gmra.mxu0 %v355
  %v445 = vpop.f32.mrf.mxu0
  %v446 = vadd.f32 0.0, %v445
  %v447 = vpop.f32.mrf.mxu0
  %448 = vmatprep.mubr.f32.mxu0 0.0
  %449 = vmatmul.mubr.f32.gmra.mxu0 %v358
  %v450 = vpop.f32.mrf.mxu0
  %v451 = vadd.f32 0.0, %v450
  %v452 = vpop.f32.mrf.mxu0
  %453 = vdwg.mxu0
  %455 = vset.pattern.permute.xlu0 0
  %456 = vperm.xlu0 %455, %v431
  %v457 = vpop.permute.xlu0 %456
  %460 = vset.pattern.permute.xlu0 0
  %461 = vperm.xlu0 %460, %v436
  %v462 = vpop.permute.xlu0 %461
  %465 = vset.pattern.permute.xlu0 0
  %466 = vperm.xlu0 %465, %v441
  %v467 = vpop.permute.xlu0 %466
  %470 = vset.pattern.permute.xlu0 0
  %471 = vperm.xlu0 %470, %v446
  %v472 = vpop.permute.xlu0 %471
  %475 = vset.pattern.permute.xlu0 0
  %476 = vperm.xlu0 %475, %v451
  %v477 = vpop.permute.xlu0 %476
  %v479 = vsub.f32 %v223, %v457
  %v480 = vsub.f32 %v224, %v462
  %v481 = vsub.f32 %v225, %v467
  %v482 = vsub.f32 %v226, %v472
  %v483 = vsub.f32 %v227, %v477
  %484 = vset.pattern.permute.xlu0 1
  %485 = vperm.xlu0 %484, %v431
  %v486 = vpop.permute.xlu0 %485
  %488 = vset.pattern.permute.xlu0 1
  %489 = vperm.xlu0 %488, %v436
  %v490 = vpop.permute.xlu0 %489
  %492 = vset.pattern.permute.xlu0 1
  %493 = vperm.xlu0 %492, %v441
  %v494 = vpop.permute.xlu0 %493
  %496 = vset.pattern.permute.xlu0 1
  %497 = vperm.xlu0 %496, %v446
  %v498 = vpop.permute.xlu0 %497
  %500 = vset.pattern.permute.xlu0 1
  %501 = vperm.xlu0 %500, %v451
  %v502 = vpop.permute.xlu0 %501
  %v504 = vmul.f32 %v479, %v486
  %v505 = vmul.f32 %v480, %v490
  %v506 = vmul.f32 %v481, %v494
  %v507 = vmul.f32 %v482, %v498
  %v508 = vmul.f32 %v483, %v502
  %v509 = vmul.f32 %v504, %v175
  %v510 = vmul.f32 %v505, %v176
  %v511 = vmul.f32 %v506, %v177
  %v512 = vmul.f32 %v507, %v178
  %v513 = vmul.f32 %v508, %v179
  %v514 = vadd.f32 %v509, %v181
  %v515 = vadd.f32 %v510, %v182
  %v516 = vadd.f32 %v511, %v183
  %v517 = vadd.f32 %v512, %v184
  %v518 = vadd.f32 %v513, %v185
  %v519 = vmax.f32 %v514, 0.0
  %v520 = vmax.f32 %v515, 0.0
  %v521 = vmax.f32 %v516, 0.0
  %v522 = vmax.f32 %v517, 0.0
  %v523 = vmax.f32 %v518, 0.0
  %v524 = vld [vmem:[%s3] sm:$0xff]
  %v525 = vld [vmem:[%s3 + $0x8] sm:$0xff]
  %v526 = vld [vmem:[%s3 + $0x10] sm:$0xff]
  %v527 = vld [vmem:[%s3 + $0x18] sm:$0xff]
  %v529 = vsel %vm186, %v519, 0
  %v532 = vsel %vm186, %v520, 0
  %v535 = vsel %vm186, %v521, 0
  %v538 = vsel %vm186, %v522, 0
  %v541 = vsel %vm186, %v523, 0
  %543 = vmatprep.subr.mxu0 0.0
  %544 = vmatpush1.msra.mxu0 0.0
  %545 = vmatprep.subr.mxu0 0.0
  %546 = vmatpush1.msra.mxu0 0.0
  %547 = vmatprep.subr.mxu0 0.0
  %548 = vmatpush1.msra.mxu0 0.0
  %549 = vmatprep.subr.mxu0 0.0
  %550 = vmatpush1.msra.mxu0 0.0
  %551 = vmatprep.subr.mxu0 0.0
  %552 = vmatpush1.msra.mxu0 0.0
  %553 = vmatprep.subr.mxu0 0.0
  %554 = vmatpush1.msra.mxu0 0.0
  %555 = vmatprep.subr.mxu0 0.0
  %556 = vmatpush1.msra.mxu0 0.0
  %557 = vmatprep.subr.mxu0 0.0
  %558 = vmatpush1.msra.mxu0 0.0
  %559 = vmatprep.subr.mxu0 0.0
  %560 = vmatpush1.msra.mxu0 0.0
  %561 = vmatprep.subr.mxu0 0.0
  %562 = vmatpush1.msra.mxu0 0.0
  %563 = vmatprep.subr.mxu0 0.0
  %564 = vmatpush1.msra.mxu0 0.0
  %565 = vmatprep.subr.mxu0 0.0
  %566 = vmatpush1.msra.mxu0 0.0
  %567 = vmatprep.subr.mxu0 0.0
  %568 = vmatpush1.msra.mxu0 %v527
  %569 = vmatprep.subr.mxu0 0.0
  %570 = vmatpush1.msra.mxu0 %v526
  %571 = vmatprep.subr.mxu0 0.0
  %572 = vmatpush1.msra.mxu0 %v525
  %573 = vmatprep.subr.mxu0 0.0
  %574 = vmatpush1.msra.mxu0 %v524
  %575 = vmatprep.subr.mxu0 0.0
  %576 = vmatpush2.msra.mxu0 0.0
  %577 = vmatprep.subr.mxu0 0.0
  %578 = vmatpush2.msra.mxu0 0.0
  %579 = vmatprep.subr.mxu0 0.0
  %580 = vmatpush2.msra.mxu0 0.0
  %581 = vmatprep.subr.mxu0 0.0
  %582 = vmatpush2.msra.mxu0 0.0
  %583 = vmatprep.subr.mxu0 0.0
  %584 = vmatpush2.msra.mxu0 0.0
  %585 = vmatprep.subr.mxu0 0.0
  %586 = vmatpush2.msra.mxu0 0.0
  %587 = vmatprep.subr.mxu0 0.0
  %588 = vmatpush2.msra.mxu0 0.0
  %589 = vmatprep.subr.mxu0 0.0
  %590 = vmatpush2.msra.mxu0 0.0
  %591 = vmatprep.subr.mxu0 0.0
  %592 = vmatpush2.msra.mxu0 0.0
  %593 = vmatprep.subr.mxu0 0.0
  %594 = vmatpush2.msra.mxu0 0.0
  %595 = vmatprep.subr.mxu0 0.0
  %596 = vmatpush2.msra.mxu0 0.0
  %597 = vmatprep.subr.mxu0 0.0
  %598 = vmatpush2.msra.mxu0 0.0
  %599 = vmatprep.subr.mxu0 0.0
  %600 = vmatpush2.msra.mxu0 0.0
  %601 = vmatprep.subr.mxu0 0.0
  %602 = vmatpush2.msra.mxu0 0.0
  %603 = vmatprep.subr.mxu0 0.0
  %604 = vmatpush2.msra.mxu0 0.0
  %605 = vmatprep.subr.mxu0 0.0
  %606 = vmatpush2.msra.mxu0 0.0
  %607 = vmatprep.mubr.f32.mxu0 0.0
  %608 = vmatmul.mubr.f32.gmra.mxu0 %v529
  %v609 = vpop.f32.mrf.mxu0
  %v610 = vadd.f32 0.0, %v609
  %v611 = vpop.f32.mrf.mxu0
  %612 = vmatprep.mubr.f32.mxu0 0.0
  %613 = vmatmul.mubr.f32.gmra.mxu0 %v532
  %v614 = vpop.f32.mrf.mxu0
  %v615 = vadd.f32 0.0, %v614
  %v616 = vpop.f32.mrf.mxu0
  %617 = vmatprep.mubr.f32.mxu0 0.0
  %618 = vmatmul.mubr.f32.gmra.mxu0 %v535
  %v619 = vpop.f32.mrf.mxu0
  %v620 = vadd.f32 0.0, %v619
  %v621 = vpop.f32.mrf.mxu0
  %622 = vmatprep.mubr.f32.mxu0 0.0
  %623 = vmatmul.mubr.f32.gmra.mxu0 %v538
  %v624 = vpop.f32.mrf.mxu0
  %v625 = vadd.f32 0.0, %v624
  %v626 = vpop.f32.mrf.mxu0
  %627 = vmatprep.mubr.f32.mxu0 0.0
  %628 = vmatmul.mubr.f32.gmra.mxu0 %v541
  %v629 = vpop.f32.mrf.mxu0
  %v630 = vadd.f32 0.0, %v629
  %v631 = vpop.f32.mrf.mxu0
  %632 = vdwg.mxu0
  %s633 = scalar_lea.vmem %s4, 80
  %v634 = vld [vmem:[%s633] sm:$0xff]
  %v635 = vld [vmem:[%s633 + $0x8] sm:$0xff]
  %v636 = vld [vmem:[%s633 + $0x10] sm:$0xff]
  %v637 = vld [vmem:[%s633 + $0x18] sm:$0xff]
  %v638 = vld [vmem:[%s633 + $0x20] sm:$0xff]
  %s639 = scalar_lea.vmem %s4, 120
  %v640 = vld [vmem:[%s639] sm:$0xff]
  %v641 = vld [vmem:[%s639 + $0x8] sm:$0xff]
  %v642 = vld [vmem:[%s639 + $0x10] sm:$0xff]
  %v643 = vld [vmem:[%s639 + $0x18] sm:$0xff]
  %v644 = vld [vmem:[%s639 + $0x20] sm:$0xff]
  %v645 = vsel %vm186, %v610, 0.0
  %646 = vadd.xlane.f32.xlu0 %v645
  %v647 = vpop.xlane.xlu0 %646
  %v648 = vsel %vm186, %v615, 0.0
  %649 = vadd.xlane.f32.xlu0 %v648
  %v650 = vpop.xlane.xlu0 %649
  %v651 = vsel %vm186, %v620, 0.0
  %652 = vadd.xlane.f32.xlu0 %v651
  %v653 = vpop.xlane.xlu0 %652
  %v654 = vsel %vm186, %v625, 0.0
  %655 = vadd.xlane.f32.xlu0 %v654
  %v656 = vpop.xlane.xlu0 %655
  %v657 = vsel %vm186, %v630, 0.0
  %658 = vadd.xlane.f32.xlu0 %v657
  %v659 = vpop.xlane.xlu0 %658
  %v660 = vsel %vm202, %v647, 0.0
  %v661 = vsel %vm202, %v650, 0.0
  %v662 = vadd.f32 %v660, %v661
  %v663 = vsel %vm202, %v653, 0.0
  %v664 = vadd.f32 %v662, %v663
  %v665 = vsel %vm202, %v656, 0.0
  %v666 = vadd.f32 %v664, %v665
  %v667 = vsel %vm202, %v659, 0.0
  %v668 = vadd.f32 %v666, %v667
  %669 = vadd.xlane.f32.xlu0 %v668
  %v670 = vpop.xlane.xlu0 %669
  %v671 = vrot.slane %v670, 4
  %v672 = vadd.f32 %v670, %v671
  %v673 = vrot.slane %v672, 2
  %v674 = vadd.f32 %v672, %v673
  %v675 = vrot.slane %v674, 1
  %v676 = vadd.f32 %v674, %v675
  %s677 = vtos %v676
  %s678 = smul.f32 %s677, 0.00078125
  %v679 = vstv %s678
  %v680 = vsub.f32 %v610, %v679
  %v681 = vsub.f32 %v615, %v679
  %v682 = vsub.f32 %v620, %v679
  %v683 = vsub.f32 %v625, %v679
  %v684 = vsub.f32 %v630, %v679
  %s685 = smul.f32 %s678, 32.0
  %v686 = vstv %s685
  %v687 = vsub.f32 %v647, %v686
  %v688 = vsub.f32 %v650, %v686
  %v689 = vsub.f32 %v653, %v686
  %v690 = vsub.f32 %v656, %v686
  %v691 = vsub.f32 %v659, %v686
  %v692 = vmul.f32 %v680, %v680
  %v693 = vmul.f32 %v681, %v681
  %v694 = vmul.f32 %v682, %v682
  %v695 = vmul.f32 %v683, %v683
  %v696 = vmul.f32 %v684, %v684
  %v697 = vsel %vm186, %v692, 0.0
  %698 = vadd.xlane.f32.xlu0 %v697
  %v699 = vpop.xlane.xlu0 %698
  %v700 = vsel %vm186, %v693, 0.0
  %701 = vadd.xlane.f32.xlu0 %v700
  %v702 = vpop.xlane.xlu0 %701
  %v703 = vsel %vm186, %v694, 0.0
  %704 = vadd.xlane.f32.xlu0 %v703
  %v705 = vpop.xlane.xlu0 %704
  %v706 = vsel %vm186, %v695, 0.0
  %707 = vadd.xlane.f32.xlu0 %v706
  %v708 = vpop.xlane.xlu0 %707
  %v709 = vsel %vm186, %v696, 0.0
  %710 = vadd.xlane.f32.xlu0 %v709
  %v711 = vpop.xlane.xlu0 %710
  %v712 = vsel %vm202, %v687, %v699
  %v713 = vsel %vm202, %v688, %v702
  %v714 = vsel %vm202, %v689, %v705
  %v715 = vsel %vm202, %v690, %v708
  %v716 = vsel %vm202, %v691, %v711
  %717 = vmatprep.subr.mxu0 0.0
  %718 = vmatpush1.msra.mxu0 0.0
  %719 = vmatprep.subr.mxu0 0.0
  %720 = vmatpush1.msra.mxu0 0.0
  %721 = vmatprep.subr.mxu0 0.0
  %722 = vmatpush1.msra.mxu0 0.0
  %723 = vmatprep.subr.mxu0 0.0
  %724 = vmatpush1.msra.mxu0 0.0
  %725 = vmatprep.subr.mxu0 0.0
  %726 = vmatpush1.msra.mxu0 0.0
  %727 = vmatprep.subr.mxu0 0.0
  %728 = vmatpush1.msra.mxu0 0.0
  %729 = vmatprep.subr.mxu0 0.0
  %730 = vmatpush1.msra.mxu0 0.0
  %731 = vmatprep.subr.mxu0 0.0
  %732 = vmatpush1.msra.mxu0 0.0
  %733 = vmatprep.subr.mxu0 0.0
  %734 = vmatpush1.msra.mxu0 0.0
  %735 = vmatprep.subr.mxu0 0.0
  %736 = vmatpush1.msra.mxu0 0.0
  %737 = vmatprep.subr.mxu0 0.0
  %738 = vmatpush1.msra.mxu0 0.0
  %739 = vmatprep.subr.mxu0 0.0
  %740 = vmatpush1.msra.mxu0 %v716
  %741 = vmatprep.subr.mxu0 0.0
  %742 = vmatpush1.msra.mxu0 %v715
  %743 = vmatprep.subr.mxu0 0.0
  %744 = vmatpush1.msra.mxu0 %v714
  %745 = vmatprep.subr.mxu0 0.0
  %746 = vmatpush1.msra.mxu0 %v713
  %747 = vmatprep.subr.mxu0 0.0
  %748 = vmatpush1.msra.mxu0 %v712
  %749 = vmatprep.subr.mxu0 0.0
  %750 = vmatpush2.msra.mxu0 0.0
  %751 = vmatprep.subr.mxu0 0.0
  %752 = vmatpush2.msra.mxu0 0.0
  %753 = vmatprep.subr.mxu0 0.0
  %754 = vmatpush2.msra.mxu0 0.0
  %755 = vmatprep.subr.mxu0 0.0
  %756 = vmatpush2.msra.mxu0 0.0
  %757 = vmatprep.subr.mxu0 0.0
  %758 = vmatpush2.msra.mxu0 0.0
  %759 = vmatprep.subr.mxu0 0.0
  %760 = vmatpush2.msra.mxu0 0.0
  %761 = vmatprep.subr.mxu0 0.0
  %762 = vmatpush2.msra.mxu0 0.0
  %763 = vmatprep.subr.mxu0 0.0
  %764 = vmatpush2.msra.mxu0 0.0
  %765 = vmatprep.subr.mxu0 0.0
  %766 = vmatpush2.msra.mxu0 0.0
  %767 = vmatprep.subr.mxu0 0.0
  %768 = vmatpush2.msra.mxu0 0.0
  %769 = vmatprep.subr.mxu0 0.0
  %770 = vmatpush2.msra.mxu0 0.0
  %771 = vmatprep.subr.mxu0 0.0
  %772 = vmatpush2.msra.mxu0 0.0
  %773 = vmatprep.subr.mxu0 0.0
  %774 = vmatpush2.msra.mxu0 0.0
  %775 = vmatprep.subr.mxu0 0.0
  %776 = vmatpush2.msra.mxu0 0.0
  %777 = vmatprep.subr.mxu0 0.0
  %778 = vmatpush2.msra.mxu0 0.0
  %779 = vmatprep.subr.mxu0 0.0
  %780 = vmatpush2.msra.mxu0 0.0
  %781 = vmatprep.mubr.f32.mxu0 0.0
  %782 = vmatmul.mubr.f32.gmra.mxu0 %v262
  %v783 = vpop.f32.mrf.mxu0
  %v784 = vadd.f32 0.0, %v783
  %v785 = vpop.f32.mrf.mxu0
  %786 = vdwg.mxu0
  %v787 = vmul.f32 %v784, 0.0015625
  %v788 = vmul.f32 %v787, %v787
  %790 = vrot.lane.b32.xlu0 %v788, 1
  %v791 = vpop.permute.xlu0 %790
  %v793 = vsub.f32 %v787, %v791
  %v794 = vadd.f32 %v793, 1e-05
  %v795 = vrsqrt.pop %v794
  %v796 = vsel %vm202, %v787, %v795
  %v798 = vsel %vm360, %v796, 0
  %800 = vmatprep.subr.mxu0 0.0
  %801 = vmatpush1.msra.mxu0 0.0
  %802 = vmatprep.subr.mxu0 0.0
  %803 = vmatpush1.msra.mxu0 0.0
  %804 = vmatprep.subr.mxu0 0.0
  %805 = vmatpush1.msra.mxu0 0.0
  %806 = vmatprep.subr.mxu0 0.0
  %807 = vmatpush1.msra.mxu0 0.0
  %808 = vmatprep.subr.mxu0 0.0
  %809 = vmatpush1.msra.mxu0 0.0
  %810 = vmatprep.subr.mxu0 0.0
  %811 = vmatpush1.msra.mxu0 0.0
  %812 = vmatprep.subr.mxu0 0.0
  %813 = vmatpush1.msra.mxu0 0.0
  %814 = vmatprep.subr.mxu0 0.0
  %815 = vmatpush1.msra.mxu0 0.0
  %816 = vmatprep.subr.mxu0 0.0
  %817 = vmatpush1.msra.mxu0 0.0
  %818 = vmatprep.subr.mxu0 0.0
  %819 = vmatpush1.msra.mxu0 0.0
  %820 = vmatprep.subr.mxu0 0.0
  %821 = vmatpush1.msra.mxu0 0.0
  %822 = vmatprep.subr.mxu0 0.0
  %823 = vmatpush1.msra.mxu0 0.0
  %824 = vmatprep.subr.mxu0 0.0
  %825 = vmatpush1.msra.mxu0 0.0
  %826 = vmatprep.subr.mxu0 0.0
  %827 = vmatpush1.msra.mxu0 0.0
  %828 = vmatprep.subr.mxu0 0.0
  %829 = vmatpush1.msra.mxu0 0.0
  %830 = vmatprep.subr.mxu0 0.0
  %831 = vmatpush1.msra.mxu0 %v798
  %832 = vmatprep.subr.mxu0 0.0
  %833 = vmatpush2.msra.mxu0 0.0
  %834 = vmatprep.subr.mxu0 0.0
  %835 = vmatpush2.msra.mxu0 0.0
  %836 = vmatprep.subr.mxu0 0.0
  %837 = vmatpush2.msra.mxu0 0.0
  %838 = vmatprep.subr.mxu0 0.0
  %839 = vmatpush2.msra.mxu0 0.0
  %840 = vmatprep.subr.mxu0 0.0
  %841 = vmatpush2.msra.mxu0 0.0
  %842 = vmatprep.subr.mxu0 0.0
  %843 = vmatpush2.msra.mxu0 0.0
  %844 = vmatprep.subr.mxu0 0.0
  %845 = vmatpush2.msra.mxu0 0.0
  %846 = vmatprep.subr.mxu0 0.0
  %847 = vmatpush2.msra.mxu0 0.0
  %848 = vmatprep.subr.mxu0 0.0
  %849 = vmatpush2.msra.mxu0 0.0
  %850 = vmatprep.subr.mxu0 0.0
  %851 = vmatpush2.msra.mxu0 0.0
  %852 = vmatprep.subr.mxu0 0.0
  %853 = vmatpush2.msra.mxu0 0.0
  %854 = vmatprep.subr.mxu0 0.0
  %855 = vmatpush2.msra.mxu0 0.0
  %856 = vmatprep.subr.mxu0 0.0
  %857 = vmatpush2.msra.mxu0 0.0
  %858 = vmatprep.subr.mxu0 0.0
  %859 = vmatpush2.msra.mxu0 0.0
  %860 = vmatprep.subr.mxu0 0.0
  %861 = vmatpush2.msra.mxu0 0.0
  %862 = vmatprep.subr.mxu0 0.0
  %863 = vmatpush2.msra.mxu0 0.0
  %864 = vmatprep.mubr.f32.mxu0 0.0
  %865 = vmatmul.mubr.f32.gmra.mxu0 %v346
  %v866 = vpop.f32.mrf.mxu0
  %v867 = vadd.f32 0.0, %v866
  %v868 = vpop.f32.mrf.mxu0
  %869 = vmatprep.mubr.f32.mxu0 0.0
  %870 = vmatmul.mubr.f32.gmra.mxu0 %v349
  %v871 = vpop.f32.mrf.mxu0
  %v872 = vadd.f32 0.0, %v871
  %v873 = vpop.f32.mrf.mxu0
  %874 = vmatprep.mubr.f32.mxu0 0.0
  %875 = vmatmul.mubr.f32.gmra.mxu0 %v352
  %v876 = vpop.f32.mrf.mxu0
  %v877 = vadd.f32 0.0, %v876
  %v878 = vpop.f32.mrf.mxu0
  %879 = vmatprep.mubr.f32.mxu0 0.0
  %880 = vmatmul.mubr.f32.gmra.mxu0 %v355
  %v881 = vpop.f32.mrf.mxu0
  %v882 = vadd.f32 0.0, %v881
  %v883 = vpop.f32.mrf.mxu0
  %884 = vmatprep.mubr.f32.mxu0 0.0
  %885 = vmatmul.mubr.f32.gmra.mxu0 %v358
  %v886 = vpop.f32.mrf.mxu0
  %v887 = vadd.f32 0.0, %v886
  %v888 = vpop.f32.mrf.mxu0
  %889 = vdwg.mxu0
  %891 = vset.pattern.permute.xlu0 0
  %892 = vperm.xlu0 %891, %v867
  %v893 = vpop.permute.xlu0 %892
  %896 = vset.pattern.permute.xlu0 0
  %897 = vperm.xlu0 %896, %v872
  %v898 = vpop.permute.xlu0 %897
  %901 = vset.pattern.permute.xlu0 0
  %902 = vperm.xlu0 %901, %v877
  %v903 = vpop.permute.xlu0 %902
  %906 = vset.pattern.permute.xlu0 0
  %907 = vperm.xlu0 %906, %v882
  %v908 = vpop.permute.xlu0 %907
  %911 = vset.pattern.permute.xlu0 0
  %912 = vperm.xlu0 %911, %v887
  %v913 = vpop.permute.xlu0 %912
  %v915 = vsub.f32 %v680, %v893
  %v916 = vsub.f32 %v681, %v898
  %v917 = vsub.f32 %v682, %v903
  %v918 = vsub.f32 %v683, %v908
  %v919 = vsub.f32 %v684, %v913
  %920 = vset.pattern.permute.xlu0 1
  %921 = vperm.xlu0 %920, %v867
  %v922 = vpop.permute.xlu0 %921
  %924 = vset.pattern.permute.xlu0 1
  %925 = vperm.xlu0 %924, %v872
  %v926 = vpop.permute.xlu0 %925
  %928 = vset.pattern.permute.xlu0 1
  %929 = vperm.xlu0 %928, %v877
  %v930 = vpop.permute.xlu0 %929
  %932 = vset.pattern.permute.xlu0 1
  %933 = vperm.xlu0 %932, %v882
  %v934 = vpop.permute.xlu0 %933
  %936 = vset.pattern.permute.xlu0 1
  %937 = vperm.xlu0 %936, %v887
  %v938 = vpop.permute.xlu0 %937
  %v940 = vmul.f32 %v915, %v922
  %v941 = vmul.f32 %v916, %v926
  %v942 = vmul.f32 %v917, %v930
  %v943 = vmul.f32 %v918, %v934
  %v944 = vmul.f32 %v919, %v938
  %v945 = vmul.f32 %v940, %v634
  %v946 = vmul.f32 %v941, %v635
  %v947 = vmul.f32 %v942, %v636
  %v948 = vmul.f32 %v943, %v637
  %v949 = vmul.f32 %v944, %v638
  %v950 = vadd.f32 %v945, %v640
  %v951 = vadd.f32 %v946, %v641
  %v952 = vadd.f32 %v947, %v642
  %v953 = vadd.f32 %v948, %v643
  %v954 = vadd.f32 %v949, %v644
  %v955 = vld [vmem:[%s2] sm:$0xff]
  %v956 = vld [vmem:[%s2 + $0x8] sm:$0xff]
  %957 = vmatprep.subr.mxu0 0.0
  %958 = vmatpush1.msra.mxu0 0.0
  %959 = vmatprep.subr.mxu0 0.0
  %960 = vmatpush1.msra.mxu0 0.0
  %961 = vmatprep.subr.mxu0 0.0
  %962 = vmatpush1.msra.mxu0 0.0
  %963 = vmatprep.subr.mxu0 0.0
  %964 = vmatpush1.msra.mxu0 0.0
  %965 = vmatprep.subr.mxu0 0.0
  %966 = vmatpush1.msra.mxu0 0.0
  %967 = vmatprep.subr.mxu0 0.0
  %968 = vmatpush1.msra.mxu0 0.0
  %969 = vmatprep.subr.mxu0 0.0
  %970 = vmatpush1.msra.mxu0 0.0
  %971 = vmatprep.subr.mxu0 0.0
  %972 = vmatpush1.msra.mxu0 0.0
  %973 = vmatprep.subr.mxu0 0.0
  %974 = vmatpush1.msra.mxu0 0.0
  %975 = vmatprep.subr.mxu0 0.0
  %976 = vmatpush1.msra.mxu0 0.0
  %977 = vmatprep.subr.mxu0 0.0
  %978 = vmatpush1.msra.mxu0 0.0
  %979 = vmatprep.subr.mxu0 0.0
  %980 = vmatpush1.msra.mxu0 0.0
  %981 = vmatprep.subr.mxu0 0.0
  %982 = vmatpush1.msra.mxu0 0.0
  %983 = vmatprep.subr.mxu0 0.0
  %984 = vmatpush1.msra.mxu0 0.0
  %985 = vmatprep.subr.mxu0 0.0
  %986 = vmatpush1.msra.mxu0 %v956
  %987 = vmatprep.subr.mxu0 0.0
  %988 = vmatpush1.msra.mxu0 %v955
  %989 = vmatprep.subr.mxu0 0.0
  %990 = vmatpush2.msra.mxu0 0.0
  %991 = vmatprep.subr.mxu0 0.0
  %992 = vmatpush2.msra.mxu0 0.0
  %993 = vmatprep.subr.mxu0 0.0
  %994 = vmatpush2.msra.mxu0 0.0
  %995 = vmatprep.subr.mxu0 0.0
  %996 = vmatpush2.msra.mxu0 0.0
  %997 = vmatprep.subr.mxu0 0.0
  %998 = vmatpush2.msra.mxu0 0.0
  %999 = vmatprep.subr.mxu0 0.0
  %1000 = vmatpush2.msra.mxu0 0.0
  %1001 = vmatprep.subr.mxu0 0.0
  %1002 = vmatpush2.msra.mxu0 0.0
  %1003 = vmatprep.subr.mxu0 0.0
  %1004 = vmatpush2.msra.mxu0 0.0
  %1005 = vmatprep.subr.mxu0 0.0
  %1006 = vmatpush2.msra.mxu0 0.0
  %1007 = vmatprep.subr.mxu0 0.0
  %1008 = vmatpush2.msra.mxu0 0.0
  %1009 = vmatprep.subr.mxu0 0.0
  %1010 = vmatpush2.msra.mxu0 0.0
  %1011 = vmatprep.subr.mxu0 0.0
  %1012 = vmatpush2.msra.mxu0 0.0
  %1013 = vmatprep.subr.mxu0 0.0
  %1014 = vmatpush2.msra.mxu0 0.0
  %1015 = vmatprep.subr.mxu0 0.0
  %1016 = vmatpush2.msra.mxu0 0.0
  %1017 = vmatprep.subr.mxu0 0.0
  %1018 = vmatpush2.msra.mxu0 0.0
  %1019 = vmatprep.subr.mxu0 0.0
  %1020 = vmatpush2.msra.mxu0 0.0
  %1021 = vmatprep.mubr.f32.mxu0 0.0
  %1022 = vmatmul.mubr.f32.gmra.mxu0 %v71
  %v1023 = vpop.f32.mrf.mxu0
  %v1024 = vadd.f32 0.0, %v1023
  %v1025 = vpop.f32.mrf.mxu0
  %1026 = vmatprep.mubr.f32.mxu0 0.0
  %1027 = vmatmul.mubr.f32.gmra.mxu0 %v74
  %v1028 = vpop.f32.mrf.mxu0
  %v1029 = vadd.f32 0.0, %v1028
  %v1030 = vpop.f32.mrf.mxu0
  %1031 = vmatprep.mubr.f32.mxu0 0.0
  %1032 = vmatmul.mubr.f32.gmra.mxu0 %v77
  %v1033 = vpop.f32.mrf.mxu0
  %v1034 = vadd.f32 0.0, %v1033
  %v1035 = vpop.f32.mrf.mxu0
  %1036 = vmatprep.mubr.f32.mxu0 0.0
  %1037 = vmatmul.mubr.f32.gmra.mxu0 %v80
  %v1038 = vpop.f32.mrf.mxu0
  %v1039 = vadd.f32 0.0, %v1038
  %v1040 = vpop.f32.mrf.mxu0
  %1041 = vmatprep.mubr.f32.mxu0 0.0
  %1042 = vmatmul.mubr.f32.gmra.mxu0 %v83
  %v1043 = vpop.f32.mrf.mxu0
  %v1044 = vadd.f32 0.0, %v1043
  %v1045 = vpop.f32.mrf.mxu0
  %1046 = vdwg.mxu0
  %s1047 = scalar_lea.vmem %s4, 160
  %v1048 = vld [vmem:[%s1047] sm:$0xff]
  %v1049 = vld [vmem:[%s1047 + $0x8] sm:$0xff]
  %v1050 = vld [vmem:[%s1047 + $0x10] sm:$0xff]
  %v1051 = vld [vmem:[%s1047 + $0x18] sm:$0xff]
  %v1052 = vld [vmem:[%s1047 + $0x20] sm:$0xff]
  %s1053 = scalar_lea.vmem %s4, 200
  %v1054 = vld [vmem:[%s1053] sm:$0xff]
  %v1055 = vld [vmem:[%s1053 + $0x8] sm:$0xff]
  %v1056 = vld [vmem:[%s1053 + $0x10] sm:$0xff]
  %v1057 = vld [vmem:[%s1053 + $0x18] sm:$0xff]
  %v1058 = vld [vmem:[%s1053 + $0x20] sm:$0xff]
  %v1059 = vsel %vm186, %v1024, 0.0
  %1060 = vadd.xlane.f32.xlu0 %v1059
  %v1061 = vpop.xlane.xlu0 %1060
  %v1062 = vsel %vm186, %v1029, 0.0
  %1063 = vadd.xlane.f32.xlu0 %v1062
  %v1064 = vpop.xlane.xlu0 %1063
  %v1065 = vsel %vm186, %v1034, 0.0
  %1066 = vadd.xlane.f32.xlu0 %v1065
  %v1067 = vpop.xlane.xlu0 %1066
  %v1068 = vsel %vm186, %v1039, 0.0
  %1069 = vadd.xlane.f32.xlu0 %v1068
  %v1070 = vpop.xlane.xlu0 %1069
  %v1071 = vsel %vm186, %v1044, 0.0
  %1072 = vadd.xlane.f32.xlu0 %v1071
  %v1073 = vpop.xlane.xlu0 %1072
  %v1074 = vsel %vm202, %v1061, 0.0
  %v1075 = vsel %vm202, %v1064, 0.0
  %v1076 = vadd.f32 %v1074, %v1075
  %v1077 = vsel %vm202, %v1067, 0.0
  %v1078 = vadd.f32 %v1076, %v1077
  %v1079 = vsel %vm202, %v1070, 0.0
  %v1080 = vadd.f32 %v1078, %v1079
  %v1081 = vsel %vm202, %v1073, 0.0
  %v1082 = vadd.f32 %v1080, %v1081
  %1083 = vadd.xlane.f32.xlu0 %v1082
  %v1084 = vpop.xlane.xlu0 %1083
  %v1085 = vrot.slane %v1084, 4
  %v1086 = vadd.f32 %v1084, %v1085
  %v1087 = vrot.slane %v1086, 2
  %v1088 = vadd.f32 %v1086, %v1087
  %v1089 = vrot.slane %v1088, 1
  %v1090 = vadd.f32 %v1088, %v1089
  %s1091 = vtos %v1090
  %s1092 = smul.f32 %s1091, 0.00078125
  %v1093 = vstv %s1092
  %v1094 = vsub.f32 %v1024, %v1093
  %v1095 = vsub.f32 %v1029, %v1093
  %v1096 = vsub.f32 %v1034, %v1093
  %v1097 = vsub.f32 %v1039, %v1093
  %v1098 = vsub.f32 %v1044, %v1093
  %s1099 = smul.f32 %s1092, 32.0
  %v1100 = vstv %s1099
  %v1101 = vsub.f32 %v1061, %v1100
  %v1102 = vsub.f32 %v1064, %v1100
  %v1103 = vsub.f32 %v1067, %v1100
  %v1104 = vsub.f32 %v1070, %v1100
  %v1105 = vsub.f32 %v1073, %v1100
  %v1106 = vmul.f32 %v1094, %v1094
  %v1107 = vmul.f32 %v1095, %v1095
  %v1108 = vmul.f32 %v1096, %v1096
  %v1109 = vmul.f32 %v1097, %v1097
  %v1110 = vmul.f32 %v1098, %v1098
  %v1111 = vsel %vm186, %v1106, 0.0
  %1112 = vadd.xlane.f32.xlu0 %v1111
  %v1113 = vpop.xlane.xlu0 %1112
  %v1114 = vsel %vm186, %v1107, 0.0
  %1115 = vadd.xlane.f32.xlu0 %v1114
  %v1116 = vpop.xlane.xlu0 %1115
  %v1117 = vsel %vm186, %v1108, 0.0
  %1118 = vadd.xlane.f32.xlu0 %v1117
  %v1119 = vpop.xlane.xlu0 %1118
  %v1120 = vsel %vm186, %v1109, 0.0
  %1121 = vadd.xlane.f32.xlu0 %v1120
  %v1122 = vpop.xlane.xlu0 %1121
  %v1123 = vsel %vm186, %v1110, 0.0
  %1124 = vadd.xlane.f32.xlu0 %v1123
  %v1125 = vpop.xlane.xlu0 %1124
  %v1126 = vsel %vm202, %v1101, %v1113
  %v1127 = vsel %vm202, %v1102, %v1116
  %v1128 = vsel %vm202, %v1103, %v1119
  %v1129 = vsel %vm202, %v1104, %v1122
  %v1130 = vsel %vm202, %v1105, %v1125
  %1131 = vmatprep.subr.mxu0 0.0
  %1132 = vmatpush1.msra.mxu0 0.0
  %1133 = vmatprep.subr.mxu0 0.0
  %1134 = vmatpush1.msra.mxu0 0.0
  %1135 = vmatprep.subr.mxu0 0.0
  %1136 = vmatpush1.msra.mxu0 0.0
  %1137 = vmatprep.subr.mxu0 0.0
  %1138 = vmatpush1.msra.mxu0 0.0
  %1139 = vmatprep.subr.mxu0 0.0
  %1140 = vmatpush1.msra.mxu0 0.0
  %1141 = vmatprep.subr.mxu0 0.0
  %1142 = vmatpush1.msra.mxu0 0.0
  %1143 = vmatprep.subr.mxu0 0.0
  %1144 = vmatpush1.msra.mxu0 0.0
  %1145 = vmatprep.subr.mxu0 0.0
  %1146 = vmatpush1.msra.mxu0 0.0
  %1147 = vmatprep.subr.mxu0 0.0
  %1148 = vmatpush1.msra.mxu0 0.0
  %1149 = vmatprep.subr.mxu0 0.0
  %1150 = vmatpush1.msra.mxu0 0.0
  %1151 = vmatprep.subr.mxu0 0.0
  %1152 = vmatpush1.msra.mxu0 0.0
  %1153 = vmatprep.subr.mxu0 0.0
  %1154 = vmatpush1.msra.mxu0 %v1130
  %1155 = vmatprep.subr.mxu0 0.0
  %1156 = vmatpush1.msra.mxu0 %v1129
  %1157 = vmatprep.subr.mxu0 0.0
  %1158 = vmatpush1.msra.mxu0 %v1128
  %1159 = vmatprep.subr.mxu0 0.0
  %1160 = vmatpush1.msra.mxu0 %v1127
  %1161 = vmatprep.subr.mxu0 0.0
  %1162 = vmatpush1.msra.mxu0 %v1126
  %1163 = vmatprep.subr.mxu0 0.0
  %1164 = vmatpush2.msra.mxu0 0.0
  %1165 = vmatprep.subr.mxu0 0.0
  %1166 = vmatpush2.msra.mxu0 0.0
  %1167 = vmatprep.subr.mxu0 0.0
  %1168 = vmatpush2.msra.mxu0 0.0
  %1169 = vmatprep.subr.mxu0 0.0
  %1170 = vmatpush2.msra.mxu0 0.0
  %1171 = vmatprep.subr.mxu0 0.0
  %1172 = vmatpush2.msra.mxu0 0.0
  %1173 = vmatprep.subr.mxu0 0.0
  %1174 = vmatpush2.msra.mxu0 0.0
  %1175 = vmatprep.subr.mxu0 0.0
  %1176 = vmatpush2.msra.mxu0 0.0
  %1177 = vmatprep.subr.mxu0 0.0
  %1178 = vmatpush2.msra.mxu0 0.0
  %1179 = vmatprep.subr.mxu0 0.0
  %1180 = vmatpush2.msra.mxu0 0.0
  %1181 = vmatprep.subr.mxu0 0.0
  %1182 = vmatpush2.msra.mxu0 0.0
  %1183 = vmatprep.subr.mxu0 0.0
  %1184 = vmatpush2.msra.mxu0 0.0
  %1185 = vmatprep.subr.mxu0 0.0
  %1186 = vmatpush2.msra.mxu0 0.0
  %1187 = vmatprep.subr.mxu0 0.0
  %1188 = vmatpush2.msra.mxu0 0.0
  %1189 = vmatprep.subr.mxu0 0.0
  %1190 = vmatpush2.msra.mxu0 0.0
  %1191 = vmatprep.subr.mxu0 0.0
  %1192 = vmatpush2.msra.mxu0 0.0
  %1193 = vmatprep.subr.mxu0 0.0
  %1194 = vmatpush2.msra.mxu0 0.0
  %1195 = vmatprep.mubr.f32.mxu0 0.0
  %1196 = vmatmul.mubr.f32.gmra.mxu0 %v262
  %v1197 = vpop.f32.mrf.mxu0
  %v1198 = vadd.f32 0.0, %v1197
  %v1199 = vpop.f32.mrf.mxu0
  %1200 = vdwg.mxu0
  %v1201 = vmul.f32 %v1198, 0.0015625
  %v1202 = vmul.f32 %v1201, %v1201
  %1204 = vrot.lane.b32.xlu0 %v1202, 1
  %v1205 = vpop.permute.xlu0 %1204
  %v1207 = vsub.f32 %v1201, %v1205
  %v1208 = vadd.f32 %v1207, 1e-05
  %v1209 = vrsqrt.pop %v1208
  %v1210 = vsel %vm202, %v1201, %v1209
  %v1212 = vsel %vm360, %v1210, 0
  %1214 = vmatprep.subr.mxu0 0.0
  %1215 = vmatpush1.msra.mxu0 0.0
  %1216 = vmatprep.subr.mxu0 0.0
  %1217 = vmatpush1.msra.mxu0 0.0
  %1218 = vmatprep.subr.mxu0 0.0
  %1219 = vmatpush1.msra.mxu0 0.0
  %1220 = vmatprep.subr.mxu0 0.0
  %1221 = vmatpush1.msra.mxu0 0.0
  %1222 = vmatprep.subr.mxu0 0.0
  %1223 = vmatpush1.msra.mxu0 0.0
  %1224 = vmatprep.subr.mxu0 0.0
  %1225 = vmatpush1.msra.mxu0 0.0
  %1226 = vmatprep.subr.mxu0 0.0
  %1227 = vmatpush1.msra.mxu0 0.0
  %1228 = vmatprep.subr.mxu0 0.0
  %1229 = vmatpush1.msra.mxu0 0.0
  %1230 = vmatprep.subr.mxu0 0.0
  %1231 = vmatpush1.msra.mxu0 0.0
  %1232 = vmatprep.subr.mxu0 0.0
  %1233 = vmatpush1.msra.mxu0 0.0
  %1234 = vmatprep.subr.mxu0 0.0
  %1235 = vmatpush1.msra.mxu0 0.0
  %1236 = vmatprep.subr.mxu0 0.0
  %1237 = vmatpush1.msra.mxu0 0.0
  %1238 = vmatprep.subr.mxu0 0.0
  %1239 = vmatpush1.msra.mxu0 0.0
  %1240 = vmatprep.subr.mxu0 0.0
  %1241 = vmatpush1.msra.mxu0 0.0
  %1242 = vmatprep.subr.mxu0 0.0
  %1243 = vmatpush1.msra.mxu0 0.0
  %1244 = vmatprep.subr.mxu0 0.0
  %1245 = vmatpush1.msra.mxu0 %v1212
  %1246 = vmatprep.subr.mxu0 0.0
  %1247 = vmatpush2.msra.mxu0 0.0
  %1248 = vmatprep.subr.mxu0 0.0
  %1249 = vmatpush2.msra.mxu0 0.0
  %1250 = vmatprep.subr.mxu0 0.0
  %1251 = vmatpush2.msra.mxu0 0.0
  %1252 = vmatprep.subr.mxu0 0.0
  %1253 = vmatpush2.msra.mxu0 0.0
  %1254 = vmatprep.subr.mxu0 0.0
  %1255 = vmatpush2.msra.mxu0 0.0
  %1256 = vmatprep.subr.mxu0 0.0
  %1257 = vmatpush2.msra.mxu0 0.0
  %1258 = vmatprep.subr.mxu0 0.0
  %1259 = vmatpush2.msra.mxu0 0.0
  %1260 = vmatprep.subr.mxu0 0.0
  %1261 = vmatpush2.msra.mxu0 0.0
  %1262 = vmatprep.subr.mxu0 0.0
  %1263 = vmatpush2.msra.mxu0 0.0
  %1264 = vmatprep.subr.mxu0 0.0
  %1265 = vmatpush2.msra.mxu0 0.0
  %1266 = vmatprep.subr.mxu0 0.0
  %1267 = vmatpush2.msra.mxu0 0.0
  %1268 = vmatprep.subr.mxu0 0.0
  %1269 = vmatpush2.msra.mxu0 0.0
  %1270 = vmatprep.subr.mxu0 0.0
  %1271 = vmatpush2.msra.mxu0 0.0
  %1272 = vmatprep.subr.mxu0 0.0
  %1273 = vmatpush2.msra.mxu0 0.0
  %1274 = vmatprep.subr.mxu0 0.0
  %1275 = vmatpush2.msra.mxu0 0.0
  %1276 = vmatprep.subr.mxu0 0.0
  %1277 = vmatpush2.msra.mxu0 0.0
  %1278 = vmatprep.mubr.f32.mxu0 0.0
  %1279 = vmatmul.mubr.f32.gmra.mxu0 %v346
  %v1280 = vpop.f32.mrf.mxu0
  %v1281 = vadd.f32 0.0, %v1280
  %v1282 = vpop.f32.mrf.mxu0
  %1283 = vmatprep.mubr.f32.mxu0 0.0
  %1284 = vmatmul.mubr.f32.gmra.mxu0 %v349
  %v1285 = vpop.f32.mrf.mxu0
  %v1286 = vadd.f32 0.0, %v1285
  %v1287 = vpop.f32.mrf.mxu0
  %1288 = vmatprep.mubr.f32.mxu0 0.0
  %1289 = vmatmul.mubr.f32.gmra.mxu0 %v352
  %v1290 = vpop.f32.mrf.mxu0
  %v1291 = vadd.f32 0.0, %v1290
  %v1292 = vpop.f32.mrf.mxu0
  %1293 = vmatprep.mubr.f32.mxu0 0.0
  %1294 = vmatmul.mubr.f32.gmra.mxu0 %v355
  %v1295 = vpop.f32.mrf.mxu0
  %v1296 = vadd.f32 0.0, %v1295
  %v1297 = vpop.f32.mrf.mxu0
  %1298 = vmatprep.mubr.f32.mxu0 0.0
  %1299 = vmatmul.mubr.f32.gmra.mxu0 %v358
  %v1300 = vpop.f32.mrf.mxu0
  %v1301 = vadd.f32 0.0, %v1300
  %v1302 = vpop.f32.mrf.mxu0
  %1303 = vdwg.mxu0
  %1305 = vset.pattern.permute.xlu0 0
  %1306 = vperm.xlu0 %1305, %v1281
  %v1307 = vpop.permute.xlu0 %1306
  %1310 = vset.pattern.permute.xlu0 0
  %1311 = vperm.xlu0 %1310, %v1286
  %v1312 = vpop.permute.xlu0 %1311
  %1315 = vset.pattern.permute.xlu0 0
  %1316 = vperm.xlu0 %1315, %v1291
  %v1317 = vpop.permute.xlu0 %1316
  %1320 = vset.pattern.permute.xlu0 0
  %1321 = vperm.xlu0 %1320, %v1296
  %v1322 = vpop.permute.xlu0 %1321
  %1325 = vset.pattern.permute.xlu0 0
  %1326 = vperm.xlu0 %1325, %v1301
  %v1327 = vpop.permute.xlu0 %1326
  %v1329 = vsub.f32 %v1094, %v1307
  %v1330 = vsub.f32 %v1095, %v1312
  %v1331 = vsub.f32 %v1096, %v1317
  %v1332 = vsub.f32 %v1097, %v1322
  %v1333 = vsub.f32 %v1098, %v1327
  %1334 = vset.pattern.permute.xlu0 1
  %1335 = vperm.xlu0 %1334, %v1281
  %v1336 = vpop.permute.xlu0 %1335
  %1338 = vset.pattern.permute.xlu0 1
  %1339 = vperm.xlu0 %1338, %v1286
  %v1340 = vpop.permute.xlu0 %1339
  %1342 = vset.pattern.permute.xlu0 1
  %1343 = vperm.xlu0 %1342, %v1291
  %v1344 = vpop.permute.xlu0 %1343
  %1346 = vset.pattern.permute.xlu0 1
  %1347 = vperm.xlu0 %1346, %v1296
  %v1348 = vpop.permute.xlu0 %1347
  %1350 = vset.pattern.permute.xlu0 1
  %1351 = vperm.xlu0 %1350, %v1301
  %v1352 = vpop.permute.xlu0 %1351
  %v1354 = vmul.f32 %v1329, %v1336
  %v1355 = vmul.f32 %v1330, %v1340
  %v1356 = vmul.f32 %v1331, %v1344
  %v1357 = vmul.f32 %v1332, %v1348
  %v1358 = vmul.f32 %v1333, %v1352
  %v1359 = vmul.f32 %v1354, %v1048
  %v1360 = vmul.f32 %v1355, %v1049
  %v1361 = vmul.f32 %v1356, %v1050
  %v1362 = vmul.f32 %v1357, %v1051
  %v1363 = vmul.f32 %v1358, %v1052
  %v1364 = vadd.f32 %v1359, %v1054
  %v1365 = vadd.f32 %v1360, %v1055
  %v1366 = vadd.f32 %v1361, %v1056
  %v1367 = vadd.f32 %v1362, %v1057
  %v1368 = vadd.f32 %v1363, %v1058
  %v1369 = vadd.f32 %v950, %v1364
  %v1370 = vadd.f32 %v951, %v1365
  %v1371 = vadd.f32 %v952, %v1366
  %v1372 = vadd.f32 %v953, %v1367
  %v1373 = vadd.f32 %v954, %v1368
  %v1374 = vmax.f32 %v1369, 0.0
  %v1375 = vmax.f32 %v1370, 0.0
  %v1376 = vmax.f32 %v1371, 0.0
  %v1377 = vmax.f32 %v1372, 0.0
  %v1378 = vmax.f32 %v1373, 0.0
  %1379 = vst.msk [vmem:[%s5] sm:$0xff] %vm186, %v1374
  %1380 = vst.msk [vmem:[%s5 + $0x8] sm:$0xff] %vm186, %v1375
  %1381 = vst.msk [vmem:[%s5 + $0x10] sm:$0xff] %vm186, %v1376
  %1382 = vst.msk [vmem:[%s5 + $0x18] sm:$0xff] %vm186, %v1377
  %1383 = vst.msk [vmem:[%s5 + $0x20] sm:$0xff] %vm186, %v1378
  // Predicated region
  $region22: #{linear_res_forward.1} parent=0 // pred_check
    _
  $region23: #{linear_res_forward.1} parent=0 // pred_check_branch
    %1385 = sbr.rel (0) target = $region25
  $region24: #{linear_res_forward.1} parent=0 // pred_region
    _
  $region25: #{linear_res_forward.1} parent=0 // pred_fallthru
    _
  // Predicated region
  $region26: #{linear_res_forward.1} parent=0 // pred_check
    _
  $region27: #{linear_res_forward.1} parent=0 // pred_check_branch
    %1387 = sbr.rel (0) target = $region29
  $region28: #{linear_res_forward.1} parent=0 // pred_region
    _
  $region29: #{linear_res_forward.1} parent=0 // pred_fallthru
    _

</llo_original>
